<compile_context>
chip_gen: v5e
topology: v5e:2x2
jax: 0.10.0
libtpu: 0.0.40
codegen_flags: <defaults>
</compile_context>

<pallas_src>
import jax
import jax.numpy as jnp
from jax.experimental import pallas as pl
from jax.experimental.pallas import tpu as pltpu

_EPS = 1e-5


def _round_up(x, m):
    return (x + m - 1) // m * m


# ----------------------------- Pallas kernel ------------------------------- #

def _make_resblock_kernel(N, C, H, W):
    Hp, Wp = H + 2, W + 2
    R = N * Hp * Wp                  # flattened padded spatial extent
    RP = _round_up(R, 128)           # lane-padded extent (128-aligned stores)
    G = 128                          # lane-aligned guard on each side (>= Wp+1)
    CNT = float(N * H * W)           # BatchNorm population size per channel
    # Tap offsets in flattened padded coordinates, (dy outer, dx inner) to
    # match the (Cout, 9*Cin) weight matrix built in the wrapper.
    OFFS = tuple((dy - 1) * Wp + (dx - 1) for dy in range(3) for dx in range(3))

    def build_taps(slab_bf, taps_ref):
        # slab_bf: (C, 2G+RP) bf16 value (cast ONCE).  Write the 9 lane-shifted
        # taps directly into the (9C, RP) bf16 VMEM scratch (no concatenate),
        # then a single K = 9*C MXU matmul consumes the whole panel.
        for t, o in enumerate(OFFS):
            taps_ref[t * C:(t + 1) * C, :] = slab_bf[:, G + o:G + o + RP]

    def bn_beta(acc, mask, beta):
        # Two-pass masked BatchNorm statistics in f32; halo / lane-pad
        # positions contribute 0 via the mask.
        mean = jnp.sum(acc * mask, axis=1, keepdims=True) / CNT
        d = acc - mean
        var = jnp.sum(d * d * mask, axis=1, keepdims=True) / CNT
        return d * jax.lax.rsqrt(var + _EPS) + beta

    def kernel(xg_ref, w1_ref, w2_ref, b1_ref, b2_ref, out_ref,
               taps_ref, slab2_ref):
        # ---- validity mask generated in-kernel (no HBM mask stream) ----
        # Exact f32 arithmetic (all values < 2^24; +0.5 margin before floor
        # makes the result robust to reciprocal-style division rounding).
        r_i = jax.lax.broadcasted_iota(jnp.int32, (1, RP), 1)
        r_f = r_i.astype(jnp.float32)
        img = r_f - jnp.floor((r_f + 0.5) / float(Hp * Wp)) * float(Hp * Wp)
        yp = jnp.floor((img + 0.5) / float(Wp))
        xp = img - yp * float(Wp)
        mask = ((r_i < R) & (yp >= 1.0) & (yp <= float(H))
                & (xp >= 1.0) & (xp <= float(W))).astype(jnp.float32)

        xg = xg_ref[...]                        # (C, 2G+RP) f32, zero guards
        slab1_bf = xg.astype(jnp.bfloat16)      # cast the whole slab ONCE

        # ---- ConvBlock 1: conv -> BN -> +beta -> ReLU ----
        build_taps(slab1_bf, taps_ref)
        acc1 = jnp.dot(w1_ref[...], taps_ref[...],
                       preferred_element_type=jnp.float32)
        y1 = jnp.maximum(bn_beta(acc1, mask, b1_ref[...]), 0.0) * mask

        # ---- guarded bf16 slab for ConvBlock 2 (guards zeroed once,
        #      interior written with one lane-aligned store) ----
        slab2_ref[:, 0:G] = jnp.zeros((C, G), jnp.bfloat16)
        slab2_ref[:, G + RP:2 * G + RP] = jnp.zeros((C, G), jnp.bfloat16)
        slab2_ref[:, G:G + RP] = y1.astype(jnp.bfloat16)

        # ---- ConvBlock 2: conv -> BN -> +beta (no ReLU) ----
        build_taps(slab2_ref[...], taps_ref)
        acc2 = jnp.dot(w2_ref[...], taps_ref[...],
                       preferred_element_type=jnp.float32)
        y2 = bn_beta(acc2, mask, b2_ref[...])

        # ---- residual add + final ReLU (lane-aligned slice & full store) ----
        identity = xg[:, G:G + RP]              # exact f32 input at valid lanes
        out_ref[...] = jnp.maximum(y2 + identity, 0.0)

    return kernel, R, RP, G


# ------------------------------ JAX wrapper -------------------------------- #

def resblock_forward(x_nchw, w1, w2, beta1, beta2):
    N, C, H, W = x_nchw.shape
    Hp, Wp = H + 2, W + 2
    kernel, R, RP, G = _make_resblock_kernel(N, C, H, W)

    xf32 = x_nchw.astype(jnp.float32)
    # channels -> sublanes; flattened zero-padded spatial -> lanes; G=128-wide
    # lane-aligned guard on each side so all 9 tap offsets are forward slices
    # and the center tap / identity / output stores are 128-lane aligned.
    x_cnhw = jnp.transpose(xf32, (1, 0, 2, 3))                     # (C, N, H, W)
    x_pad = jnp.pad(x_cnhw, ((0, 0), (0, 0), (1, 1), (1, 1)))      # (C, N, Hp, Wp)
    xg = jnp.pad(x_pad.reshape(C, R), ((0, 0), (G, G + RP - R)))   # (C, 2G+RP)

    # Conv weight (Cout, Cin, 3, 3) -> (Cout, 9*Cin) matching the tap stacking.
    def w_mat(w):
        return jnp.transpose(w, (0, 2, 3, 1)).reshape(C, 9 * C).astype(jnp.bfloat16)

    b1 = beta1.astype(jnp.float32).reshape(C, 1)
    b2 = beta2.astype(jnp.float32).reshape(C, 1)

    flops = 2 * (2 * C * (9 * C) * RP) + 24 * C * RP
    bytes_accessed = (C * (2 * G + RP) + C * RP) * 4 + 2 * C * 9 * C * 2 + 2 * C * 4

    vmem = lambda: pl.BlockSpec(memory_space=pltpu.MemorySpace.VMEM)
    out_flat = pl.pallas_call(
        kernel,
        out_shape=jax.ShapeDtypeStruct((C, RP), jnp.float32),
        in_specs=[vmem()] * 5,
        out_specs=vmem(),
        scratch_shapes=[
            pltpu.VMEM((9 * C, RP), jnp.bfloat16),      # tap panel (reused x2)
            pltpu.VMEM((C, 2 * G + RP), jnp.bfloat16),  # guarded slab for conv2
        ],
        compiler_params=pltpu.CompilerParams(vmem_limit_bytes=32 * 1024 * 1024),
        cost_estimate=pl.CostEstimate(flops=flops, transcendentals=2 * C,
                                      bytes_accessed=bytes_accessed),
    )(xg, w_mat(w1), w_mat(w2), b1, b2)

    out = out_flat[:, :R].reshape(C, N, Hp, Wp)[:, :, 1:H + 1, 1:W + 1]
    return jnp.transpose(out, (1, 0, 2, 3))                        # back to NCHW


# ---------------------------- pure-JAX reference ---------------------------- #

def _convblock_ref(x_nhwc, w_oihw, beta, relu):
    y = jax.lax.conv_general_dilated(
        x_nhwc, jnp.transpose(w_oihw, (2, 3, 1, 0)),
        window_strides=(1, 1), padding="SAME",
        dimension_numbers=("NHWC", "HWIO", "NHWC"))
    mean = y.mean(axis=(0, 1, 2), keepdims=True)
    var = ((y - mean) ** 2).mean(axis=(0, 1, 2), keepdims=True)
    y = (y - mean) * jax.lax.rsqrt(var + _EPS) + beta.reshape(1, 1, 1, -1)
    return jnp.maximum(y, 0.0) if relu else y


def resblock_ref(x_nchw, w1, w2, beta1, beta2):
    x = jnp.transpose(x_nchw, (0, 2, 3, 1)).astype(jnp.float32)
    y = _convblock_ref(x, w1, beta1, True)
    y = _convblock_ref(y, w2, beta2, False)
    y = jnp.maximum(y + x, 0.0)
    return jnp.transpose(y, (0, 3, 1, 2))


# ---------------------------------- main ------------------------------------ #

if __name__ == "__main__":
    key = jax.random.PRNGKey(0)
    N, C, H, W = 2, 8, 16, 16
    k_x, k_w1, k_w2, k_b1, k_b2 = jax.random.split(key, 5)

    x = jax.random.normal(k_x, (N, C, H, W), dtype=jnp.float32)

    # Kaiming normal, mode='fan_out', relu: std = sqrt(2 / (Cout * kH * kW))
    std = (2.0 / (C * 3 * 3)) ** 0.5
    w1 = jax.random.normal(k_w1, (C, C, 3, 3), dtype=jnp.float32) * std
    w2 = jax.random.normal(k_w2, (C, C, 3, 3), dtype=jnp.float32) * std
    # beta is zero-initialized in the module; use small non-zero values so the
    # learnable-bias path is actually exercised by the check.
    beta1 = 0.1 * jax.random.normal(k_b1, (C,), dtype=jnp.float32)
    beta2 = 0.1 * jax.random.normal(k_b2, (C,), dtype=jnp.float32)

    out = jax.block_until_ready(jax.jit(resblock_forward)(x, w1, w2, beta1, beta2))

    ref = resblock_ref(x, w1, w2, beta1, beta2)
    assert out.shape == x.shape, (out.shape, x.shape)
    err = float(jnp.max(jnp.abs(out - ref)))
    # bf16 matmul operands (with f32 accumulation / BN) => looser than pure-f32.
    assert err < 5e-2, f"max abs err vs reference: {err}"

    print("KERNEL_OK")
</pallas_src>

<mosaic_0001>
module attributes {stable_mosaic.version = 11 : i64} {
  func.func @kernel(%arg0: memref<8x1024xf32, #tpu.memory_space<vmem>>, %arg1: memref<8x72xbf16, #tpu.memory_space<vmem>>, %arg2: memref<8x72xbf16, #tpu.memory_space<vmem>>, %arg3: memref<8x1xf32, #tpu.memory_space<vmem>>, %arg4: memref<8x1xf32, #tpu.memory_space<vmem>>, %arg5: memref<8x768xf32, #tpu.memory_space<vmem>>, %arg6: memref<72x768xbf16, #tpu.memory_space<vmem>>, %arg7: memref<8x1024xbf16, #tpu.memory_space<vmem>>) attributes {dimension_semantics = [], scalar_prefetch = 0 : i64, scratch_operands = 2 : i64, tpu.core_type = #tpu.core_type<tc>} {
    %0 = tpu.iota {dimensions = array<i32: 1>} : vector<1x768xi32>
    %1 = arith.sitofp %0 : vector<1x768xi32> to vector<1x768xf32>
    %cst = arith.constant 5.000000e-01 : f32
    %2 = vector.broadcast %cst : f32 to vector<1x768xf32>
    %3 = arith.addf %1, %2 : vector<1x768xf32>
    %cst_0 = arith.constant 3.240000e+02 : f32
    %4 = vector.broadcast %cst_0 : f32 to vector<1x768xf32>
    %5 = arith.divf %3, %4 : vector<1x768xf32>
    %6 = math.floor %5 : vector<1x768xf32>
    %cst_1 = arith.constant 3.240000e+02 : f32
    %7 = vector.broadcast %cst_1 : f32 to vector<1x768xf32>
    %8 = arith.mulf %6, %7 : vector<1x768xf32>
    %9 = arith.subf %1, %8 : vector<1x768xf32>
    %cst_2 = arith.constant 5.000000e-01 : f32
    %10 = vector.broadcast %cst_2 : f32 to vector<1x768xf32>
    %11 = arith.addf %9, %10 : vector<1x768xf32>
    %cst_3 = arith.constant 1.800000e+01 : f32
    %12 = vector.broadcast %cst_3 : f32 to vector<1x768xf32>
    %13 = arith.divf %11, %12 : vector<1x768xf32>
    %14 = math.floor %13 : vector<1x768xf32>
    %cst_4 = arith.constant 1.800000e+01 : f32
    %15 = vector.broadcast %cst_4 : f32 to vector<1x768xf32>
    %16 = arith.mulf %14, %15 : vector<1x768xf32>
    %17 = arith.subf %9, %16 : vector<1x768xf32>
    %c648_i32 = arith.constant 648 : i32
    %18 = vector.broadcast %c648_i32 : i32 to vector<1x768xi32>
    %19 = arith.cmpi slt, %0, %18 : vector<1x768xi32>
    %cst_5 = arith.constant 1.000000e+00 : f32
    %20 = vector.broadcast %cst_5 : f32 to vector<1x768xf32>
    %21 = arith.cmpf oge, %14, %20 : vector<1x768xf32>
    %22 = arith.andi %19, %21 : vector<1x768xi1>
    %cst_6 = arith.constant 1.600000e+01 : f32
    %23 = vector.broadcast %cst_6 : f32 to vector<1x768xf32>
    %24 = arith.cmpf ole, %14, %23 : vector<1x768xf32>
    %25 = arith.andi %22, %24 : vector<1x768xi1>
    %cst_7 = arith.constant 1.000000e+00 : f32
    %26 = vector.broadcast %cst_7 : f32 to vector<1x768xf32>
    %27 = arith.cmpf oge, %17, %26 : vector<1x768xf32>
    %28 = arith.andi %25, %27 : vector<1x768xi1>
    %cst_8 = arith.constant 1.600000e+01 : f32
    %29 = vector.broadcast %cst_8 : f32 to vector<1x768xf32>
    %30 = arith.cmpf ole, %17, %29 : vector<1x768xf32>
    %31 = arith.andi %28, %30 : vector<1x768xi1>
    %32 = arith.extui %31 : vector<1x768xi1> to vector<1x768xi32>
    %33 = arith.sitofp %32 : vector<1x768xi32> to vector<1x768xf32>
    %c0 = arith.constant 0 : index
    %c0_9 = arith.constant 0 : index
    %34 = vector.load %arg0[%c0, %c0_9] : memref<8x1024xf32, #tpu.memory_space<vmem>>, vector<8x1024xf32>
    %35 = arith.truncf %34 : vector<8x1024xf32> to vector<8x1024xbf16>
    %36 = vector.extract_strided_slice %35 {offsets = [0, 109], sizes = [8, 768], strides = [1, 1]} : vector<8x1024xbf16> to vector<8x768xbf16>
    %c0_10 = arith.constant 0 : index
    %c0_11 = arith.constant 0 : index
    %37 = vector.load %arg6[%c0_10, %c0_11] : memref<72x768xbf16, #tpu.memory_space<vmem>>, vector<8x768xbf16>
    tpu.vector_store %arg6[%c0_10, %c0_11], %36 {strides = array<i32>} : memref<72x768xbf16, #tpu.memory_space<vmem>>, vector<8x768xbf16>,
    %38 = vector.extract_strided_slice %35 {offsets = [0, 110], sizes = [8, 768], strides = [1, 1]} : vector<8x1024xbf16> to vector<8x768xbf16>
    %c8 = arith.constant 8 : index
    %c0_12 = arith.constant 0 : index
    %39 = vector.load %arg6[%c8, %c0_12] : memref<72x768xbf16, #tpu.memory_space<vmem>>, vector<8x768xbf16>
    tpu.vector_store %arg6[%c8, %c0_12], %38 {strides = array<i32>} : memref<72x768xbf16, #tpu.memory_space<vmem>>, vector<8x768xbf16>,
    %40 = vector.extract_strided_slice %35 {offsets = [0, 111], sizes = [8, 768], strides = [1, 1]} : vector<8x1024xbf16> to vector<8x768xbf16>
    %c16 = arith.constant 16 : index
    %c0_13 = arith.constant 0 : index
    %41 = vector.load %arg6[%c16, %c0_13] : memref<72x768xbf16, #tpu.memory_space<vmem>>, vector<8x768xbf16>
    tpu.vector_store %arg6[%c16, %c0_13], %40 {strides = array<i32>} : memref<72x768xbf16, #tpu.memory_space<vmem>>, vector<8x768xbf16>,
    %42 = vector.extract_strided_slice %35 {offsets = [0, 127], sizes = [8, 768], strides = [1, 1]} : vector<8x1024xbf16> to vector<8x768xbf16>
    %c24 = arith.constant 24 : index
    %c0_14 = arith.constant 0 : index
    %43 = vector.load %arg6[%c24, %c0_14] : memref<72x768xbf16, #tpu.memory_space<vmem>>, vector<8x768xbf16>
    tpu.vector_store %arg6[%c24, %c0_14], %42 {strides = array<i32>} : memref<72x768xbf16, #tpu.memory_space<vmem>>, vector<8x768xbf16>,
    %44 = vector.extract_strided_slice %35 {offsets = [0, 128], sizes = [8, 768], strides = [1, 1]} : vector<8x1024xbf16> to vector<8x768xbf16>
    %c32 = arith.constant 32 : index
    %c0_15 = arith.constant 0 : index
    %45 = vector.load %arg6[%c32, %c0_15] : memref<72x768xbf16, #tpu.memory_space<vmem>>, vector<8x768xbf16>
    tpu.vector_store %arg6[%c32, %c0_15], %44 {strides = array<i32>} : memref<72x768xbf16, #tpu.memory_space<vmem>>, vector<8x768xbf16>,
    %46 = vector.extract_strided_slice %35 {offsets = [0, 129], sizes = [8, 768], strides = [1, 1]} : vector<8x1024xbf16> to vector<8x768xbf16>
    %c40 = arith.constant 40 : index
    %c0_16 = arith.constant 0 : index
    %47 = vector.load %arg6[%c40, %c0_16] : memref<72x768xbf16, #tpu.memory_space<vmem>>, vector<8x768xbf16>
    tpu.vector_store %arg6[%c40, %c0_16], %46 {strides = array<i32>} : memref<72x768xbf16, #tpu.memory_space<vmem>>, vector<8x768xbf16>,
    %48 = vector.extract_strided_slice %35 {offsets = [0, 145], sizes = [8, 768], strides = [1, 1]} : vector<8x1024xbf16> to vector<8x768xbf16>
    %c48 = arith.constant 48 : index
    %c0_17 = arith.constant 0 : index
    %49 = vector.load %arg6[%c48, %c0_17] : memref<72x768xbf16, #tpu.memory_space<vmem>>, vector<8x768xbf16>
    tpu.vector_store %arg6[%c48, %c0_17], %48 {strides = array<i32>} : memref<72x768xbf16, #tpu.memory_space<vmem>>, vector<8x768xbf16>,
    %50 = vector.extract_strided_slice %35 {offsets = [0, 146], sizes = [8, 768], strides = [1, 1]} : vector<8x1024xbf16> to vector<8x768xbf16>
    %c56 = arith.constant 56 : index
    %c0_18 = arith.constant 0 : index
    %51 = vector.load %arg6[%c56, %c0_18] : memref<72x768xbf16, #tpu.memory_space<vmem>>, vector<8x768xbf16>
    tpu.vector_store %arg6[%c56, %c0_18], %50 {strides = array<i32>} : memref<72x768xbf16, #tpu.memory_space<vmem>>, vector<8x768xbf16>,
    %52 = vector.extract_strided_slice %35 {offsets = [0, 147], sizes = [8, 768], strides = [1, 1]} : vector<8x1024xbf16> to vector<8x768xbf16>
    %c64 = arith.constant 64 : index
    %c0_19 = arith.constant 0 : index
    %53 = vector.load %arg6[%c64, %c0_19] : memref<72x768xbf16, #tpu.memory_space<vmem>>, vector<8x768xbf16>
    tpu.vector_store %arg6[%c64, %c0_19], %52 {strides = array<i32>} : memref<72x768xbf16, #tpu.memory_space<vmem>>, vector<8x768xbf16>,
    %c0_20 = arith.constant 0 : index
    %c0_21 = arith.constant 0 : index
    %54 = vector.load %arg1[%c0_20, %c0_21] : memref<8x72xbf16, #tpu.memory_space<vmem>>, vector<8x72xbf16>
    %c0_22 = arith.constant 0 : index
    %c0_23 = arith.constant 0 : index
    %55 = vector.load %arg6[%c0_22, %c0_23] : memref<72x768xbf16, #tpu.memory_space<vmem>>, vector<72x768xbf16>
    %cst_24 = arith.constant dense<0.000000e+00> : vector<8x768xf32>
    %56 = tpu.matmul %54, %55, %cst_24 {dimension_numbers = #tpu.dot_dimension_numbers<[1], [0], [0], [1], [0, 0, 1, 1], [], []>} : vector<8x72xbf16>, vector<72x768xbf16>, vector<8x768xf32> -> vector<8x768xf32>
    %c0_25 = arith.constant 0 : index
    %c0_26 = arith.constant 0 : index
    %57 = vector.load %arg3[%c0_25, %c0_26] : memref<8x1xf32, #tpu.memory_space<vmem>>, vector<8x1xf32>
    %58 = vector.broadcast %33 : vector<1x768xf32> to vector<8x768xf32>
    %59 = arith.mulf %56, %58 : vector<8x768xf32>
    %cst_27 = arith.constant dense<0.000000e+00> : vector<8xf32>
    %60 = vector.multi_reduction <add>, %59, %cst_27 [1] : vector<8x768xf32> to vector<8xf32>
    %61 = vector.shape_cast %60 : vector<8xf32> to vector<8x1xf32>
    %cst_28 = arith.constant 5.120000e+02 : f32
    %62 = vector.broadcast %cst_28 : f32 to vector<8x1xf32>
    %63 = arith.divf %61, %62 : vector<8x1xf32>
    %64 = vector.broadcast %63 : vector<8x1xf32> to vector<8x768xf32>
    %65 = arith.subf %56, %64 : vector<8x768xf32>
    %66 = arith.mulf %65, %65 : vector<8x768xf32>
    %67 = vector.broadcast %33 : vector<1x768xf32> to vector<8x768xf32>
    %68 = arith.mulf %66, %67 : vector<8x768xf32>
    %cst_29 = arith.constant dense<0.000000e+00> : vector<8xf32>
    %69 = vector.multi_reduction <add>, %68, %cst_29 [1] : vector<8x768xf32> to vector<8xf32>
    %70 = vector.shape_cast %69 : vector<8xf32> to vector<8x1xf32>
    %cst_30 = arith.constant 5.120000e+02 : f32
    %71 = vector.broadcast %cst_30 : f32 to vector<8x1xf32>
    %72 = arith.divf %70, %71 : vector<8x1xf32>
    %cst_31 = arith.constant 9.99999974E-6 : f32
    %73 = vector.broadcast %cst_31 : f32 to vector<8x1xf32>
    %74 = arith.addf %72, %73 : vector<8x1xf32>
    %75 = math.rsqrt %74 : vector<8x1xf32>
    %76 = vector.broadcast %75 : vector<8x1xf32> to vector<8x768xf32>
    %77 = arith.mulf %65, %76 : vector<8x768xf32>
    %78 = vector.broadcast %57 : vector<8x1xf32> to vector<8x768xf32>
    %79 = arith.addf %77, %78 : vector<8x768xf32>
    %cst_32 = arith.constant 0.000000e+00 : f32
    %80 = vector.broadcast %cst_32 : f32 to vector<8x768xf32>
    %81 = arith.maximumf %79, %80 : vector<8x768xf32>
    %82 = vector.broadcast %33 : vector<1x768xf32> to vector<8x768xf32>
    %83 = arith.mulf %81, %82 : vector<8x768xf32>
    %cst_33 = arith.constant 0.000000e+00 : bf16
    %84 = vector.broadcast %cst_33 : bf16 to vector<8x128xbf16>
    %c0_34 = arith.constant 0 : index
    %c0_35 = arith.constant 0 : index
    %85 = vector.load %arg7[%c0_34, %c0_35] : memref<8x1024xbf16, #tpu.memory_space<vmem>>, vector<8x128xbf16>
    tpu.vector_store %arg7[%c0_34, %c0_35], %84 {strides = array<i32>} : memref<8x1024xbf16, #tpu.memory_space<vmem>>, vector<8x128xbf16>,
    %cst_36 = arith.constant 0.000000e+00 : bf16
    %86 = vector.broadcast %cst_36 : bf16 to vector<8x128xbf16>
    %c0_37 = arith.constant 0 : index
    %c896 = arith.constant 896 : index
    %87 = vector.load %arg7[%c0_37, %c896] : memref<8x1024xbf16, #tpu.memory_space<vmem>>, vector<8x128xbf16>
    tpu.vector_store %arg7[%c0_37, %c896], %86 {strides = array<i32>} : memref<8x1024xbf16, #tpu.memory_space<vmem>>, vector<8x128xbf16>,
    %88 = arith.truncf %83 : vector<8x768xf32> to vector<8x768xbf16>
    %c0_38 = arith.constant 0 : index
    %c128 = arith.constant 128 : index
    %89 = vector.load %arg7[%c0_38, %c128] : memref<8x1024xbf16, #tpu.memory_space<vmem>>, vector<8x768xbf16>
    tpu.vector_store %arg7[%c0_38, %c128], %88 {strides = array<i32>} : memref<8x1024xbf16, #tpu.memory_space<vmem>>, vector<8x768xbf16>,
    %c0_39 = arith.constant 0 : index
    %c0_40 = arith.constant 0 : index
    %90 = vector.load %arg7[%c0_39, %c0_40] : memref<8x1024xbf16, #tpu.memory_space<vmem>>, vector<8x1024xbf16>
    %91 = vector.extract_strided_slice %90 {offsets = [0, 109], sizes = [8, 768], strides = [1, 1]} : vector<8x1024xbf16> to vector<8x768xbf16>
    %c0_41 = arith.constant 0 : index
    %c0_42 = arith.constant 0 : index
    %92 = vector.load %arg6[%c0_41, %c0_42] : memref<72x768xbf16, #tpu.memory_space<vmem>>, vector<8x768xbf16>
    tpu.vector_store %arg6[%c0_41, %c0_42], %91 {strides = array<i32>} : memref<72x768xbf16, #tpu.memory_space<vmem>>, vector<8x768xbf16>,
    %93 = vector.extract_strided_slice %90 {offsets = [0, 110], sizes = [8, 768], strides = [1, 1]} : vector<8x1024xbf16> to vector<8x768xbf16>
    %c8_43 = arith.constant 8 : index
    %c0_44 = arith.constant 0 : index
    %94 = vector.load %arg6[%c8_43, %c0_44] : memref<72x768xbf16, #tpu.memory_space<vmem>>, vector<8x768xbf16>
    tpu.vector_store %arg6[%c8_43, %c0_44], %93 {strides = array<i32>} : memref<72x768xbf16, #tpu.memory_space<vmem>>, vector<8x768xbf16>,
    %95 = vector.extract_strided_slice %90 {offsets = [0, 111], sizes = [8, 768], strides = [1, 1]} : vector<8x1024xbf16> to vector<8x768xbf16>
    %c16_45 = arith.constant 16 : index
    %c0_46 = arith.constant 0 : index
    %96 = vector.load %arg6[%c16_45, %c0_46] : memref<72x768xbf16, #tpu.memory_space<vmem>>, vector<8x768xbf16>
    tpu.vector_store %arg6[%c16_45, %c0_46], %95 {strides = array<i32>} : memref<72x768xbf16, #tpu.memory_space<vmem>>, vector<8x768xbf16>,
    %97 = vector.extract_strided_slice %90 {offsets = [0, 127], sizes = [8, 768], strides = [1, 1]} : vector<8x1024xbf16> to vector<8x768xbf16>
    %c24_47 = arith.constant 24 : index
    %c0_48 = arith.constant 0 : index
    %98 = vector.load %arg6[%c24_47, %c0_48] : memref<72x768xbf16, #tpu.memory_space<vmem>>, vector<8x768xbf16>
    tpu.vector_store %arg6[%c24_47, %c0_48], %97 {strides = array<i32>} : memref<72x768xbf16, #tpu.memory_space<vmem>>, vector<8x768xbf16>,
    %99 = vector.extract_strided_slice %90 {offsets = [0, 128], sizes = [8, 768], strides = [1, 1]} : vector<8x1024xbf16> to vector<8x768xbf16>
    %c32_49 = arith.constant 32 : index
    %c0_50 = arith.constant 0 : index
    %100 = vector.load %arg6[%c32_49, %c0_50] : memref<72x768xbf16, #tpu.memory_space<vmem>>, vector<8x768xbf16>
    tpu.vector_store %arg6[%c32_49, %c0_50], %99 {strides = array<i32>} : memref<72x768xbf16, #tpu.memory_space<vmem>>, vector<8x768xbf16>,
    %101 = vector.extract_strided_slice %90 {offsets = [0, 129], sizes = [8, 768], strides = [1, 1]} : vector<8x1024xbf16> to vector<8x768xbf16>
    %c40_51 = arith.constant 40 : index
    %c0_52 = arith.constant 0 : index
    %102 = vector.load %arg6[%c40_51, %c0_52] : memref<72x768xbf16, #tpu.memory_space<vmem>>, vector<8x768xbf16>
    tpu.vector_store %arg6[%c40_51, %c0_52], %101 {strides = array<i32>} : memref<72x768xbf16, #tpu.memory_space<vmem>>, vector<8x768xbf16>,
    %103 = vector.extract_strided_slice %90 {offsets = [0, 145], sizes = [8, 768], strides = [1, 1]} : vector<8x1024xbf16> to vector<8x768xbf16>
    %c48_53 = arith.constant 48 : index
    %c0_54 = arith.constant 0 : index
    %104 = vector.load %arg6[%c48_53, %c0_54] : memref<72x768xbf16, #tpu.memory_space<vmem>>, vector<8x768xbf16>
    tpu.vector_store %arg6[%c48_53, %c0_54], %103 {strides = array<i32>} : memref<72x768xbf16, #tpu.memory_space<vmem>>, vector<8x768xbf16>,
    %105 = vector.extract_strided_slice %90 {offsets = [0, 146], sizes = [8, 768], strides = [1, 1]} : vector<8x1024xbf16> to vector<8x768xbf16>
    %c56_55 = arith.constant 56 : index
    %c0_56 = arith.constant 0 : index
    %106 = vector.load %arg6[%c56_55, %c0_56] : memref<72x768xbf16, #tpu.memory_space<vmem>>, vector<8x768xbf16>
    tpu.vector_store %arg6[%c56_55, %c0_56], %105 {strides = array<i32>} : memref<72x768xbf16, #tpu.memory_space<vmem>>, vector<8x768xbf16>,
    %107 = vector.extract_strided_slice %90 {offsets = [0, 147], sizes = [8, 768], strides = [1, 1]} : vector<8x1024xbf16> to vector<8x768xbf16>
    %c64_57 = arith.constant 64 : index
    %c0_58 = arith.constant 0 : index
    %108 = vector.load %arg6[%c64_57, %c0_58] : memref<72x768xbf16, #tpu.memory_space<vmem>>, vector<8x768xbf16>
    tpu.vector_store %arg6[%c64_57, %c0_58], %107 {strides = array<i32>} : memref<72x768xbf16, #tpu.memory_space<vmem>>, vector<8x768xbf16>,
    %c0_59 = arith.constant 0 : index
    %c0_60 = arith.constant 0 : index
    %109 = vector.load %arg2[%c0_59, %c0_60] : memref<8x72xbf16, #tpu.memory_space<vmem>>, vector<8x72xbf16>
    %c0_61 = arith.constant 0 : index
    %c0_62 = arith.constant 0 : index
    %110 = vector.load %arg6[%c0_61, %c0_62] : memref<72x768xbf16, #tpu.memory_space<vmem>>, vector<72x768xbf16>
    %cst_63 = arith.constant dense<0.000000e+00> : vector<8x768xf32>
    %111 = tpu.matmul %109, %110, %cst_63 {dimension_numbers = #tpu.dot_dimension_numbers<[1], [0], [0], [1], [0, 0, 1, 1], [], []>} : vector<8x72xbf16>, vector<72x768xbf16>, vector<8x768xf32> -> vector<8x768xf32>
    %c0_64 = arith.constant 0 : index
    %c0_65 = arith.constant 0 : index
    %112 = vector.load %arg4[%c0_64, %c0_65] : memref<8x1xf32, #tpu.memory_space<vmem>>, vector<8x1xf32>
    %113 = vector.broadcast %33 : vector<1x768xf32> to vector<8x768xf32>
    %114 = arith.mulf %111, %113 : vector<8x768xf32>
    %cst_66 = arith.constant dense<0.000000e+00> : vector<8xf32>
    %115 = vector.multi_reduction <add>, %114, %cst_66 [1] : vector<8x768xf32> to vector<8xf32>
    %116 = vector.shape_cast %115 : vector<8xf32> to vector<8x1xf32>
    %cst_67 = arith.constant 5.120000e+02 : f32
    %117 = vector.broadcast %cst_67 : f32 to vector<8x1xf32>
    %118 = arith.divf %116, %117 : vector<8x1xf32>
    %119 = vector.broadcast %118 : vector<8x1xf32> to vector<8x768xf32>
    %120 = arith.subf %111, %119 : vector<8x768xf32>
    %121 = arith.mulf %120, %120 : vector<8x768xf32>
    %122 = vector.broadcast %33 : vector<1x768xf32> to vector<8x768xf32>
    %123 = arith.mulf %121, %122 : vector<8x768xf32>
    %cst_68 = arith.constant dense<0.000000e+00> : vector<8xf32>
    %124 = vector.multi_reduction <add>, %123, %cst_68 [1] : vector<8x768xf32> to vector<8xf32>
    %125 = vector.shape_cast %124 : vector<8xf32> to vector<8x1xf32>
    %cst_69 = arith.constant 5.120000e+02 : f32
    %126 = vector.broadcast %cst_69 : f32 to vector<8x1xf32>
    %127 = arith.divf %125, %126 : vector<8x1xf32>
    %cst_70 = arith.constant 9.99999974E-6 : f32
    %128 = vector.broadcast %cst_70 : f32 to vector<8x1xf32>
    %129 = arith.addf %127, %128 : vector<8x1xf32>
    %130 = math.rsqrt %129 : vector<8x1xf32>
    %131 = vector.broadcast %130 : vector<8x1xf32> to vector<8x768xf32>
    %132 = arith.mulf %120, %131 : vector<8x768xf32>
    %133 = vector.broadcast %112 : vector<8x1xf32> to vector<8x768xf32>
    %134 = arith.addf %132, %133 : vector<8x768xf32>
    %135 = vector.extract_strided_slice %34 {offsets = [0, 128], sizes = [8, 768], strides = [1, 1]} : vector<8x1024xf32> to vector<8x768xf32>
    %136 = arith.addf %134, %135 : vector<8x768xf32>
    %cst_71 = arith.constant 0.000000e+00 : f32
    %137 = vector.broadcast %cst_71 : f32 to vector<8x768xf32>
    %138 = arith.maximumf %136, %137 : vector<8x768xf32>
    %c0_72 = arith.constant 0 : index
    %c0_73 = arith.constant 0 : index
    %139 = vector.load %arg5[%c0_72, %c0_73] : memref<8x768xf32, #tpu.memory_space<vmem>>, vector<8x768xf32>
    tpu.vector_store %arg5[%c0_72, %c0_73], %138 {strides = array<i32>} : memref<8x768xf32, #tpu.memory_space<vmem>>, vector<8x768xf32>,
    return
  }
}

</mosaic_0001>

<llo_original>
// kernel: resblock_forward.1
$region0: #{resblock_forward.1}
  #allocation0 [shape = 'u32[]', space=smem, size = 0x4, offset = 0x4, fixed_abs, tag = 'smem constant byte address 0x4 - core index']
  #allocation1 [shape = 'u32[72,128]{1,0:T(1,128)}', space=vmem, size = 0x9000, scoped, tag = 'internal scratch']
  #allocation2 [shape = 'bf16[72,768]{1,0:T(8,128)(2,1)}', space=vmem, size = 0x1b000, scoped, tag = 'scratch operand']
  #allocation3 [shape = 'bf16[8,1024]{1,0:T(8,128)(2,1)}', space=vmem, size = 0x4000, scoped, tag = 'scratch operand']
  %s0 = inlined_call_operand.vmem [shape: f32[8,1024], index: 0, kind: input, shape index: {}]
  %s1 = inlined_call_operand.vmem [shape: bf16[8,72], index: 1, kind: input, shape index: {}]
  %s2 = inlined_call_operand.vmem [shape: bf16[8,72], index: 2, kind: input, shape index: {}]
  %s3 = inlined_call_operand.vmem [shape: f32[8,1], index: 3, kind: input, shape index: {}]
  %s4 = inlined_call_operand.vmem [shape: f32[8,1], index: 4, kind: input, shape index: {}]
  %s5 = inlined_call_operand.vmem [shape: f32[8,768], index: 5, kind: output, shape index: {}]
  %s6 = sld [smem:[#allocation0]]
  $region30: #{resblock_forward.1} parent=0
    _
  %s8 = ssub.s32 1, %s6
  %s9 = scalar_select 0, %s8, %s6
  // Predicated region
  $region2: #{resblock_forward.1} parent=0 // pred_check
    _
  $region3: #{resblock_forward.1} parent=0 // pred_check_branch
    %11 = sbr.rel (0) target = $region5
  $region4: #{resblock_forward.1} parent=0 // pred_region
    _
  $region5: #{resblock_forward.1} parent=0 // pred_fallthru
    _
  // Predicated region
  $region6: #{resblock_forward.1} parent=0 // pred_check
    _
  $region7: #{resblock_forward.1} parent=0 // pred_check_branch
    %13 = sbr.rel (0) target = $region9
  $region8: #{resblock_forward.1} parent=0 // pred_region
    _
  $region9: #{resblock_forward.1} parent=0 // pred_fallthru
    _
  // Predicated region
  $region10: #{resblock_forward.1} parent=0 // pred_check
    _
  $region11: #{resblock_forward.1} parent=0 // pred_check_branch
    %15 = sbr.rel (0) target = $region13
  $region12: #{resblock_forward.1} parent=0 // pred_region
    _
  $region13: #{resblock_forward.1} parent=0 // pred_fallthru
    _
  // Predicated region
  $region14: #{resblock_forward.1} parent=0 // pred_check
    _
  $region15: #{resblock_forward.1} parent=0 // pred_check_branch
    %17 = sbr.rel (0) target = $region17
  $region16: #{resblock_forward.1} parent=0 // pred_region
    _
  $region17: #{resblock_forward.1} parent=0 // pred_fallthru
    _
  // Predicated region
  $region18: #{resblock_forward.1} parent=0 // pred_check
    _
  $region19: #{resblock_forward.1} parent=0 // pred_check_branch
    %19 = sbr.rel (0) target = $region21
  $region20: #{resblock_forward.1} parent=0 // pred_region
    _
  $region21: #{resblock_forward.1} parent=0 // pred_fallthru
    _
  %v21 = vlaneseq
  %v22 = vand.u32 %v21, 127
  %v23 = vadd.s32 %v22, 128
  %v24 = vadd.s32 %v22, 256
  %v25 = vadd.s32 %v22, 384
  %v26 = vadd.s32 %v22, 512
  %v27 = vadd.s32 %v22, 640
  %v28 = vcvt.s32.f32 %v22
  %v29 = vcvt.s32.f32 %v23
  %v30 = vcvt.s32.f32 %v24
  %v31 = vcvt.s32.f32 %v25
  %v32 = vcvt.s32.f32 %v26
  %v33 = vcvt.s32.f32 %v27
  %v34 = vadd.f32 %v28, 0.5
  %v35 = vadd.f32 %v29, 0.5
  %v36 = vadd.f32 %v30, 0.5
  %v37 = vadd.f32 %v31, 0.5
  %v38 = vadd.f32 %v32, 0.5
  %v39 = vadd.f32 %v33, 0.5
  %v40 = vrcp.pop 324.0
  %v41 = vmul.f32 324.0, %v40
  %v42 = vsub.f32 1.0, %v41
  %v43 = vmul.f32 %v40, %v42
  %v44 = vadd.f32 %v40, %v43
  %vm45 = vweird.f32 %v40
  %v46 = vsel %vm45, %v40, %v44
  %v47 = vmul.f32 %v34, %v46
  %v48 = vmul.f32 %v35, %v46
  %v49 = vmul.f32 %v36, %v46
  %v50 = vmul.f32 %v37, %v46
  %v51 = vmul.f32 %v38, %v46
  %v52 = vmul.f32 %v39, %v46
  %v53 = vfloor.f32 %v47
  %v54 = vfloor.f32 %v48
  %v55 = vfloor.f32 %v49
  %v56 = vfloor.f32 %v50
  %v57 = vfloor.f32 %v51
  %v58 = vfloor.f32 %v52
  %v59 = vmul.f32 %v53, 324.0
  %v60 = vmul.f32 %v54, 324.0
  %v61 = vmul.f32 %v55, 324.0
  %v62 = vmul.f32 %v56, 324.0
  %v63 = vmul.f32 %v57, 324.0
  %v64 = vmul.f32 %v58, 324.0
  %v65 = vsub.f32 %v28, %v59
  %v66 = vsub.f32 %v29, %v60
  %v67 = vsub.f32 %v30, %v61
  %v68 = vsub.f32 %v31, %v62
  %v69 = vsub.f32 %v32, %v63
  %v70 = vsub.f32 %v33, %v64
  %v71 = vadd.f32 %v65, 0.5
  %v72 = vadd.f32 %v66, 0.5
  %v73 = vadd.f32 %v67, 0.5
  %v74 = vadd.f32 %v68, 0.5
  %v75 = vadd.f32 %v69, 0.5
  %v76 = vadd.f32 %v70, 0.5
  %v77 = vrcp.pop 18.0
  %v78 = vmul.f32 18.0, %v77
  %v79 = vsub.f32 1.0, %v78
  %v80 = vmul.f32 %v77, %v79
  %v81 = vadd.f32 %v77, %v80
  %vm82 = vweird.f32 %v77
  %v83 = vsel %vm82, %v77, %v81
  %v84 = vmul.f32 %v71, %v83
  %v85 = vmul.f32 %v72, %v83
  %v86 = vmul.f32 %v73, %v83
  %v87 = vmul.f32 %v74, %v83
  %v88 = vmul.f32 %v75, %v83
  %v89 = vmul.f32 %v76, %v83
  %v90 = vfloor.f32 %v84
  %v91 = vfloor.f32 %v85
  %v92 = vfloor.f32 %v86
  %v93 = vfloor.f32 %v87
  %v94 = vfloor.f32 %v88
  %v95 = vfloor.f32 %v89
  %v96 = vmul.f32 %v90, 18.0
  %v97 = vmul.f32 %v91, 18.0
  %v98 = vmul.f32 %v92, 18.0
  %v99 = vmul.f32 %v93, 18.0
  %v100 = vmul.f32 %v94, 18.0
  %v101 = vmul.f32 %v95, 18.0
  %v102 = vsub.f32 %v65, %v96
  %v103 = vsub.f32 %v66, %v97
  %v104 = vsub.f32 %v67, %v98
  %v105 = vsub.f32 %v68, %v99
  %v106 = vsub.f32 %v69, %v100
  %v107 = vsub.f32 %v70, %v101
  %vm108 = vcmp.lt.s32.totalorder %v22, 648
  %vm109 = vcmp.lt.s32.totalorder %v23, 648
  %vm110 = vcmp.lt.s32.totalorder %v24, 648
  %vm111 = vcmp.lt.s32.totalorder %v25, 648
  %vm112 = vcmp.lt.s32.totalorder %v26, 648
  %vm113 = vcmp.lt.s32.totalorder %v27, 648
  %vm114 = vcmp.ge.f32.partialorder %v90, 1.0
  %vm115 = vcmp.ge.f32.partialorder %v91, 1.0
  %vm116 = vcmp.ge.f32.partialorder %v92, 1.0
  %vm117 = vcmp.ge.f32.partialorder %v93, 1.0
  %vm118 = vcmp.ge.f32.partialorder %v94, 1.0
  %vm119 = vcmp.ge.f32.partialorder %v95, 1.0
  %vm120 = vmand %vm108, %vm114
  %vm121 = vmand %vm109, %vm115
  %vm122 = vmand %vm110, %vm116
  %vm123 = vmand %vm111, %vm117
  %vm124 = vmand %vm112, %vm118
  %vm125 = vmand %vm113, %vm119
  %vm126 = vcmp.le.f32.partialorder %v90, 16.0
  %vm127 = vcmp.le.f32.partialorder %v91, 16.0
  %vm128 = vcmp.le.f32.partialorder %v92, 16.0
  %vm129 = vcmp.le.f32.partialorder %v93, 16.0
  %vm130 = vcmp.le.f32.partialorder %v94, 16.0
  %vm131 = vcmp.le.f32.partialorder %v95, 16.0
  %vm132 = vmand %vm120, %vm126
  %vm133 = vmand %vm121, %vm127
  %vm134 = vmand %vm122, %vm128
  %vm135 = vmand %vm123, %vm129
  %vm136 = vmand %vm124, %vm130
  %vm137 = vmand %vm125, %vm131
  %vm138 = vcmp.ge.f32.partialorder %v102, 1.0
  %vm139 = vcmp.ge.f32.partialorder %v103, 1.0
  %vm140 = vcmp.ge.f32.partialorder %v104, 1.0
  %vm141 = vcmp.ge.f32.partialorder %v105, 1.0
  %vm142 = vcmp.ge.f32.partialorder %v106, 1.0
  %vm143 = vcmp.ge.f32.partialorder %v107, 1.0
  %vm144 = vmand %vm132, %vm138
  %vm145 = vmand %vm133, %vm139
  %vm146 = vmand %vm134, %vm140
  %vm147 = vmand %vm135, %vm141
  %vm148 = vmand %vm136, %vm142
  %vm149 = vmand %vm137, %vm143
  %vm150 = vcmp.le.f32.partialorder %v102, 16.0
  %vm151 = vcmp.le.f32.partialorder %v103, 16.0
  %vm152 = vcmp.le.f32.partialorder %v104, 16.0
  %vm153 = vcmp.le.f32.partialorder %v105, 16.0
  %vm154 = vcmp.le.f32.partialorder %v106, 16.0
  %vm155 = vcmp.le.f32.partialorder %v107, 16.0
  %vm156 = vmand %vm144, %vm150
  %vm157 = vmand %vm145, %vm151
  %vm158 = vmand %vm146, %vm152
  %vm159 = vmand %vm147, %vm153
  %vm160 = vmand %vm148, %vm154
  %vm161 = vmand %vm149, %vm155
  %v162 = vsel %vm156, 1, 0
  %v163 = vsel %vm157, 1, 0
  %v164 = vsel %vm158, 1, 0
  %v165 = vsel %vm159, 1, 0
  %v166 = vsel %vm160, 1, 0
  %v167 = vsel %vm161, 1, 0
  %v168 = vcvt.s32.f32 %v162
  %v169 = vcvt.s32.f32 %v163
  %v170 = vcvt.s32.f32 %v164
  %v171 = vcvt.s32.f32 %v165
  %v172 = vcvt.s32.f32 %v166
  %v173 = vcvt.s32.f32 %v167
  %v174 = vld [vmem:[%s0] sm:$0xff]
  %v175 = vld [vmem:[%s0 + $0x8] sm:$0xff]
  %v176 = vld [vmem:[%s0 + $0x10] sm:$0xff]
  %v177 = vld [vmem:[%s0 + $0x18] sm:$0xff]
  %v178 = vld [vmem:[%s0 + $0x20] sm:$0xff]
  %v179 = vld [vmem:[%s0 + $0x28] sm:$0xff]
  %v180 = vld [vmem:[%s0 + $0x30] sm:$0xff]
  %v181 = vld [vmem:[%s0 + $0x38] sm:$0xff]
  %v182 = vpack.c.bf16 %v175, %v174
  %v183 = vpack.c.bf16 %v177, %v176
  %v184 = vpack.c.bf16 %v179, %v178
  %v185 = vpack.c.bf16 %v181, %v180
  %190 = vrot.lane.b32.xlu0 %v182, 19
  %v191 = vpop.permute.xlu0 %190
  %192 = vrot.lane.b32.xlu0 %v183, 19
  %v193 = vpop.permute.xlu0 %192
  %194 = vrot.lane.b32.xlu0 %v184, 19
  %v195 = vpop.permute.xlu0 %194
  %196 = vrot.lane.b32.xlu0 %v185, 19
  %v197 = vpop.permute.xlu0 %196
  %v198 = vrot.slane %v191, 4
  %v199 = vrot.slane %v193, 4
  %v200 = vrot.slane %v195, 4
  %v201 = vrot.slane %v197, 4
  %vm202 = vcmask 1043456
  %v203 = vsel %vm202, %v198, %v199
  %vm204 = vcmask 154624
  %v205 = vsel %vm204, %v191, %v203
  %v206 = vsel %vm202, %v199, %v200
  %v207 = vsel %vm204, %v193, %v206
  %v208 = vsel %vm202, %v200, %v201
  %v209 = vsel %vm204, %v195, %v208
  %213 = vst [vmem:[#allocation2] sm:$0xff] %v205
  %214 = vst [vmem:[#allocation2 + $0x8] sm:$0xff] %v207
  %215 = vst [vmem:[#allocation2 + $0x10] sm:$0xff] %v209
  %216 = vrot.lane.b32.xlu0 %v182, 18
  %v217 = vpop.permute.xlu0 %216
  %218 = vrot.lane.b32.xlu0 %v183, 18
  %v219 = vpop.permute.xlu0 %218
  %220 = vrot.lane.b32.xlu0 %v184, 18
  %v221 = vpop.permute.xlu0 %220
  %222 = vrot.lane.b32.xlu0 %v185, 18
  %v223 = vpop.permute.xlu0 %222
  %v224 = vrot.slane %v217, 4
  %v225 = vrot.slane %v219, 4
  %v226 = vrot.slane %v221, 4
  %v227 = vrot.slane %v223, 4
  %v228 = vsel %vm202, %v224, %v225
  %vm229 = vcmask 146432
  %v230 = vsel %vm229, %v217, %v228
  %v231 = vsel %vm202, %v225, %v226
  %v232 = vsel %vm229, %v219, %v231
  %v233 = vsel %vm202, %v226, %v227
  %v234 = vsel %vm229, %v221, %v233
  %238 = vst [vmem:[#allocation2 + $0x18] sm:$0xff] %v230
  %239 = vst [vmem:[#allocation2 + $0x20] sm:$0xff] %v232
  %240 = vst [vmem:[#allocation2 + $0x28] sm:$0xff] %v234
  %241 = vrot.lane.b32.xlu0 %v182, 17
  %v242 = vpop.permute.xlu0 %241
  %243 = vrot.lane.b32.xlu0 %v183, 17
  %v244 = vpop.permute.xlu0 %243
  %245 = vrot.lane.b32.xlu0 %v184, 17
  %v246 = vpop.permute.xlu0 %245
  %247 = vrot.lane.b32.xlu0 %v185, 17
  %v248 = vpop.permute.xlu0 %247
  %v249 = vrot.slane %v242, 4
  %v250 = vrot.slane %v244, 4
  %v251 = vrot.slane %v246, 4
  %v252 = vrot.slane %v248, 4
  %v253 = vsel %vm202, %v249, %v250
  %vm254 = vcmask 138240
  %v255 = vsel %vm254, %v242, %v253
  %v256 = vsel %vm202, %v250, %v251
  %v257 = vsel %vm254, %v244, %v256
  %v258 = vsel %vm202, %v251, %v252
  %v259 = vsel %vm254, %v246, %v258
  %263 = vst [vmem:[#allocation2 + $0x30] sm:$0xff] %v255
  %264 = vst [vmem:[#allocation2 + $0x38] sm:$0xff] %v257
  %265 = vst [vmem:[#allocation2 + $0x40] sm:$0xff] %v259
  %266 = vrot.lane.b32.xlu0 %v182, 1
  %v267 = vpop.permute.xlu0 %266
  %268 = vrot.lane.b32.xlu0 %v183, 1
  %v269 = vpop.permute.xlu0 %268
  %270 = vrot.lane.b32.xlu0 %v184, 1
  %v271 = vpop.permute.xlu0 %270
  %272 = vrot.lane.b32.xlu0 %v185, 1
  %v273 = vpop.permute.xlu0 %272
  %v274 = vrot.slane %v267, 4
  %v275 = vrot.slane %v269, 4
  %v276 = vrot.slane %v271, 4
  %v277 = vrot.slane %v273, 4
  %v278 = vsel %vm202, %v274, %v275
  %vm279 = vcmask 7168
  %v280 = vsel %vm279, %v267, %v278
  %v281 = vsel %vm202, %v275, %v276
  %v282 = vsel %vm279, %v269, %v281
  %v283 = vsel %vm202, %v276, %v277
  %v284 = vsel %vm279, %v271, %v283
  %288 = vst [vmem:[#allocation2 + $0x48] sm:$0xff] %v280
  %289 = vst [vmem:[#allocation2 + $0x50] sm:$0xff] %v282
  %290 = vst [vmem:[#allocation2 + $0x58] sm:$0xff] %v284
  %v291 = vrot.slane %v182, 4
  %v292 = vrot.slane %v183, 4
  %v293 = vrot.slane %v184, 4
  %v294 = vrot.slane %v185, 4
  %v295 = vsel %vm202, %v291, %v292
  %v296 = vsel %vm202, %v292, %v293
  %v297 = vsel %vm202, %v293, %v294
  %301 = vst [vmem:[#allocation2 + $0x60] sm:$0xff] %v295
  %302 = vst [vmem:[#allocation2 + $0x68] sm:$0xff] %v296
  %303 = vst [vmem:[#allocation2 + $0x70] sm:$0xff] %v297
  %304 = vrot.lane.b32.xlu0 %v182, 127
  %v305 = vpop.permute.xlu0 %304
  %306 = vrot.lane.b32.xlu0 %v183, 127
  %v307 = vpop.permute.xlu0 %306
  %308 = vrot.lane.b32.xlu0 %v184, 127
  %v309 = vpop.permute.xlu0 %308
  %310 = vrot.lane.b32.xlu0 %v185, 127
  %v311 = vpop.permute.xlu0 %310
  %v312 = vrot.slane %v305, 4
  %v313 = vrot.slane %v307, 4
  %v314 = vrot.slane %v309, 4
  %v315 = vrot.slane %v311, 4
  %v316 = vsel %vm202, %v312, %v313
  %vm317 = vcmask 1039360
  %v318 = vsel %vm317, %v316, %v307
  %v319 = vsel %vm202, %v313, %v314
  %v320 = vsel %vm317, %v319, %v309
  %v321 = vsel %vm202, %v314, %v315
  %v322 = vsel %vm317, %v321, %v311
  %326 = vst [vmem:[#allocation2 + $0x78] sm:$0xff] %v318
  %327 = vst [vmem:[#allocation2 + $0x80] sm:$0xff] %v320
  %328 = vst [vmem:[#allocation2 + $0x88] sm:$0xff] %v322
  %329 = vrot.lane.b32.xlu0 %v182, 111
  %v330 = vpop.permute.xlu0 %329
  %331 = vrot.lane.b32.xlu0 %v183, 111
  %v332 = vpop.permute.xlu0 %331
  %333 = vrot.lane.b32.xlu0 %v184, 111
  %v334 = vpop.permute.xlu0 %333
  %335 = vrot.lane.b32.xlu0 %v185, 111
  %v336 = vpop.permute.xlu0 %335
  %v337 = vrot.slane %v330, 4
  %v338 = vrot.slane %v332, 4
  %v339 = vrot.slane %v334, 4
  %v340 = vrot.slane %v336, 4
  %v341 = vsel %vm202, %v337, %v338
  %vm342 = vcmask 908288
  %v343 = vsel %vm342, %v341, %v332
  %v344 = vsel %vm202, %v338, %v339
  %v345 = vsel %vm342, %v344, %v334
  %v346 = vsel %vm202, %v339, %v340
  %v347 = vsel %vm342, %v346, %v336
  %351 = vst [vmem:[#allocation2 + $0x90] sm:$0xff] %v343
  %352 = vst [vmem:[#allocation2 + $0x98] sm:$0xff] %v345
  %353 = vst [vmem:[#allocation2 + $0xa0] sm:$0xff] %v347
  %354 = vrot.lane.b32.xlu0 %v182, 110
  %v355 = vpop.permute.xlu0 %354
  %356 = vrot.lane.b32.xlu0 %v183, 110
  %v357 = vpop.permute.xlu0 %356
  %358 = vrot.lane.b32.xlu0 %v184, 110
  %v359 = vpop.permute.xlu0 %358
  %360 = vrot.lane.b32.xlu0 %v185, 110
  %v361 = vpop.permute.xlu0 %360
  %v362 = vrot.slane %v355, 4
  %v363 = vrot.slane %v357, 4
  %v364 = vrot.slane %v359, 4
  %v365 = vrot.slane %v361, 4
  %v366 = vsel %vm202, %v362, %v363
  %vm367 = vcmask 900096
  %v368 = vsel %vm367, %v366, %v357
  %v369 = vsel %vm202, %v363, %v364
  %v370 = vsel %vm367, %v369, %v359
  %v371 = vsel %vm202, %v364, %v365
  %v372 = vsel %vm367, %v371, %v361
  %376 = vst [vmem:[#allocation2 + $0xa8] sm:$0xff] %v368
  %377 = vst [vmem:[#allocation2 + $0xb0] sm:$0xff] %v370
  %378 = vst [vmem:[#allocation2 + $0xb8] sm:$0xff] %v372
  %379 = vrot.lane.b32.xlu0 %v182, 109
  %v380 = vpop.permute.xlu0 %379
  %381 = vrot.lane.b32.xlu0 %v183, 109
  %v382 = vpop.permute.xlu0 %381
  %383 = vrot.lane.b32.xlu0 %v184, 109
  %v384 = vpop.permute.xlu0 %383
  %385 = vrot.lane.b32.xlu0 %v185, 109
  %v386 = vpop.permute.xlu0 %385
  %v387 = vrot.slane %v380, 4
  %v388 = vrot.slane %v382, 4
  %v389 = vrot.slane %v384, 4
  %v390 = vrot.slane %v386, 4
  %v391 = vsel %vm202, %v387, %v388
  %vm392 = vcmask 891904
  %v393 = vsel %vm392, %v391, %v382
  %v394 = vsel %vm202, %v388, %v389
  %v395 = vsel %vm392, %v394, %v384
  %v396 = vsel %vm202, %v389, %v390
  %v397 = vsel %vm392, %v396, %v386
  %401 = vst [vmem:[#allocation2 + $0xc0] sm:$0xff] %v393
  %402 = vst [vmem:[#allocation2 + $0xc8] sm:$0xff] %v395
  %403 = vst [vmem:[#allocation2 + $0xd0] sm:$0xff] %v397
  %v404 = vld [vmem:[%s1] sm:$0xf]
  %v405 = vld [vmem:[#allocation2] sm:$0xff]
  %v406 = vld [vmem:[#allocation2 + $0x8] sm:$0xff]
  %v407 = vld [vmem:[#allocation2 + $0x10] sm:$0xff]
  %v408 = vld [vmem:[#allocation2 + $0x18] sm:$0xff]
  %v409 = vld [vmem:[#allocation2 + $0x20] sm:$0xff]
  %v410 = vld [vmem:[#allocation2 + $0x28] sm:$0xff]
  %v411 = vld [vmem:[#allocation2 + $0x30] sm:$0xff]
  %v412 = vld [vmem:[#allocation2 + $0x38] sm:$0xff]
  %v413 = vld [vmem:[#allocation2 + $0x40] sm:$0xff]
  %v414 = vld [vmem:[#allocation2 + $0x48] sm:$0xff]
  %v415 = vld [vmem:[#allocation2 + $0x50] sm:$0xff]
  %v416 = vld [vmem:[#allocation2 + $0x58] sm:$0xff]
  %v417 = vld [vmem:[#allocation2 + $0x60] sm:$0xff]
  %v418 = vld [vmem:[#allocation2 + $0x68] sm:$0xff]
  %v419 = vld [vmem:[#allocation2 + $0x70] sm:$0xff]
  %v420 = vld [vmem:[#allocation2 + $0x78] sm:$0xff]
  %v421 = vld [vmem:[#allocation2 + $0x80] sm:$0xff]
  %v422 = vld [vmem:[#allocation2 + $0x88] sm:$0xff]
  %v423 = vld [vmem:[#allocation2 + $0x90] sm:$0xff]
  %v424 = vld [vmem:[#allocation2 + $0x98] sm:$0xff]
  %v425 = vld [vmem:[#allocation2 + $0xa0] sm:$0xff]
  %v426 = vld [vmem:[#allocation2 + $0xa8] sm:$0xff]
  %v427 = vld [vmem:[#allocation2 + $0xb0] sm:$0xff]
  %v428 = vld [vmem:[#allocation2 + $0xb8] sm:$0xff]
  %v429 = vld [vmem:[#allocation2 + $0xc0] sm:$0xff]
  %v430 = vld [vmem:[#allocation2 + $0xc8] sm:$0xff]
  %v431 = vld [vmem:[#allocation2 + $0xd0] sm:$0xff]
  %v459 = vunpack.c.l.b16 %v405
  %v460 = vunpack.c.h.b16 %v405
  %v461 = vunpack.c.l.b16 %v406
  %v462 = vunpack.c.h.b16 %v406
  %v463 = vunpack.c.l.b16 %v407
  %v464 = vunpack.c.h.b16 %v407
  %v465 = vunpack.c.l.b16 %v408
  %v466 = vunpack.c.h.b16 %v408
  %v467 = vunpack.c.l.b16 %v409
  %v468 = vunpack.c.h.b16 %v409
  %v469 = vunpack.c.l.b16 %v410
  %v470 = vunpack.c.h.b16 %v410
  %v471 = vunpack.c.l.b16 %v411
  %v472 = vunpack.c.h.b16 %v411
  %v473 = vunpack.c.l.b16 %v412
  %v474 = vunpack.c.h.b16 %v412
  %v475 = vunpack.c.l.b16 %v413
  %v476 = vunpack.c.h.b16 %v413
  %v477 = vunpack.c.l.b16 %v414
  %v478 = vunpack.c.h.b16 %v414
  %v479 = vunpack.c.l.b16 %v415
  %v480 = vunpack.c.h.b16 %v415
  %v481 = vunpack.c.l.b16 %v416
  %v482 = vunpack.c.h.b16 %v416
  %v483 = vunpack.c.l.b16 %v417
  %v484 = vunpack.c.h.b16 %v417
  %v485 = vunpack.c.l.b16 %v418
  %v486 = vunpack.c.h.b16 %v418
  %v487 = vunpack.c.l.b16 %v419
  %v488 = vunpack.c.h.b16 %v419
  %v489 = vunpack.c.l.b16 %v420
  %v490 = vunpack.c.h.b16 %v420
  %v491 = vunpack.c.l.b16 %v421
  %v492 = vunpack.c.h.b16 %v421
  %v493 = vunpack.c.l.b16 %v422
  %v494 = vunpack.c.h.b16 %v422
  %v495 = vunpack.c.l.b16 %v423
  %v496 = vunpack.c.h.b16 %v423
  %v497 = vunpack.c.l.b16 %v424
  %v498 = vunpack.c.h.b16 %v424
  %v499 = vunpack.c.l.b16 %v425
  %v500 = vunpack.c.h.b16 %v425
  %v501 = vunpack.c.l.b16 %v426
  %v502 = vunpack.c.h.b16 %v426
  %v503 = vunpack.c.l.b16 %v427
  %v504 = vunpack.c.h.b16 %v427
  %v505 = vunpack.c.l.b16 %v428
  %v506 = vunpack.c.h.b16 %v428
  %v507 = vunpack.c.l.b16 %v429
  %v508 = vunpack.c.h.b16 %v429
  %v509 = vunpack.c.l.b16 %v430
  %v510 = vunpack.c.h.b16 %v430
  %v511 = vunpack.c.l.b16 %v431
  %v512 = vunpack.c.h.b16 %v431
  %v513 = vpack.c.b16 %v465, %v459
  %v514 = vpack.c.b16 %v466, %v460
  %v515 = vpack.c.b16 %v467, %v461
  %v516 = vpack.c.b16 %v468, %v462
  %v517 = vpack.c.b16 %v469, %v463
  %v518 = vpack.c.b16 %v470, %v464
  %v519 = vpack.c.b16 %v477, %v471
  %v520 = vpack.c.b16 %v478, %v472
  %v521 = vpack.c.b16 %v479, %v473
  %v522 = vpack.c.b16 %v480, %v474
  %v523 = vpack.c.b16 %v481, %v475
  %v524 = vpack.c.b16 %v482, %v476
  %v525 = vpack.c.b16 %v489, %v483
  %v526 = vpack.c.b16 %v490, %v484
  %v527 = vpack.c.b16 %v491, %v485
  %v528 = vpack.c.b16 %v492, %v486
  %v529 = vpack.c.b16 %v493, %v487
  %v530 = vpack.c.b16 %v494, %v488
  %v531 = vpack.c.b16 %v501, %v495
  %v532 = vpack.c.b16 %v502, %v496
  %v533 = vpack.c.b16 %v503, %v497
  %v534 = vpack.c.b16 %v504, %v498
  %v535 = vpack.c.b16 %v505, %v499
  %v536 = vpack.c.b16 %v506, %v500
  %v537 = vpack.c.b16 %v507, %v507
  %v538 = vpack.c.b16 %v508, %v508
  %v539 = vpack.c.b16 %v509, %v509
  %v540 = vpack.c.b16 %v510, %v510
  %v541 = vpack.c.b16 %v511, %v511
  %v542 = vpack.c.b16 %v512, %v512
  %vm567 = vcmask 588800
  %v569 = vsel %vm567, %v404, 0
  %vm571 = vcmask 1043456
  %v573 = vsel %vm571, %v537, 0
  %v576 = vsel %vm571, %v538, 0
  %v579 = vsel %vm571, %v539, 0
  %v582 = vsel %vm571, %v540, 0
  %v585 = vsel %vm571, %v541, 0
  %v588 = vsel %vm571, %v542, 0
  %590 = vmatpush.bf16.msra.mxu0 0
  %591 = vmatpush.bf16.msra.mxu0 0
  %592 = vmatpush.bf16.msra.mxu0 0
  %593 = vmatpush.bf16.msra.mxu0 %v573
  %594 = vmatpush.bf16.msra.mxu0 %v531
  %595 = vmatpush.bf16.msra.mxu0 %v525
  %596 = vmatpush.bf16.msra.mxu0 %v519
  %597 = vmatpush.bf16.msra.mxu0 %v513
  %598 = vmatmul.bf16.gmra.mxu0 %v569
  %v599 = vpop.f32.mrf.mxu0
  %v600 = vadd.f32 0.0, %v599
  %v601 = vpop.f32.mrf.mxu0
  %602 = vdwg.mxu0
  %603 = vmatpush.bf16.msra.mxu0 0
  %604 = vmatpush.bf16.msra.mxu0 0
  %605 = vmatpush.bf16.msra.mxu0 0
  %606 = vmatpush.bf16.msra.mxu0 %v576
  %607 = vmatpush.bf16.msra.mxu0 %v532
  %608 = vmatpush.bf16.msra.mxu0 %v526
  %609 = vmatpush.bf16.msra.mxu0 %v520
  %610 = vmatpush.bf16.msra.mxu0 %v514
  %611 = vmatmul.bf16.gmra.mxu0 %v569
  %v612 = vpop.f32.mrf.mxu0
  %v613 = vadd.f32 0.0, %v612
  %v614 = vpop.f32.mrf.mxu0
  %615 = vdwg.mxu0
  %616 = vmatpush.bf16.msra.mxu0 0
  %617 = vmatpush.bf16.msra.mxu0 0
  %618 = vmatpush.bf16.msra.mxu0 0
  %619 = vmatpush.bf16.msra.mxu0 %v579
  %620 = vmatpush.bf16.msra.mxu0 %v533
  %621 = vmatpush.bf16.msra.mxu0 %v527
  %622 = vmatpush.bf16.msra.mxu0 %v521
  %623 = vmatpush.bf16.msra.mxu0 %v515
  %624 = vmatmul.bf16.gmra.mxu0 %v569
  %v625 = vpop.f32.mrf.mxu0
  %v626 = vadd.f32 0.0, %v625
  %v627 = vpop.f32.mrf.mxu0
  %628 = vdwg.mxu0
  %629 = vmatpush.bf16.msra.mxu0 0
  %630 = vmatpush.bf16.msra.mxu0 0
  %631 = vmatpush.bf16.msra.mxu0 0
  %632 = vmatpush.bf16.msra.mxu0 %v582
  %633 = vmatpush.bf16.msra.mxu0 %v534
  %634 = vmatpush.bf16.msra.mxu0 %v528
  %635 = vmatpush.bf16.msra.mxu0 %v522
  %636 = vmatpush.bf16.msra.mxu0 %v516
  %637 = vmatmul.bf16.gmra.mxu0 %v569
  %v638 = vpop.f32.mrf.mxu0
  %v639 = vadd.f32 0.0, %v638
  %v640 = vpop.f32.mrf.mxu0
  %641 = vdwg.mxu0
  %642 = vmatpush.bf16.msra.mxu0 0
  %643 = vmatpush.bf16.msra.mxu0 0
  %644 = vmatpush.bf16.msra.mxu0 0
  %645 = vmatpush.bf16.msra.mxu0 %v585
  %646 = vmatpush.bf16.msra.mxu0 %v535
  %647 = vmatpush.bf16.msra.mxu0 %v529
  %648 = vmatpush.bf16.msra.mxu0 %v523
  %649 = vmatpush.bf16.msra.mxu0 %v517
  %650 = vmatmul.bf16.gmra.mxu0 %v569
  %v651 = vpop.f32.mrf.mxu0
  %v652 = vadd.f32 0.0, %v651
  %v653 = vpop.f32.mrf.mxu0
  %654 = vdwg.mxu0
  %655 = vmatpush.bf16.msra.mxu0 0
  %656 = vmatpush.bf16.msra.mxu0 0
  %657 = vmatpush.bf16.msra.mxu0 0
  %658 = vmatpush.bf16.msra.mxu0 %v588
  %659 = vmatpush.bf16.msra.mxu0 %v536
  %660 = vmatpush.bf16.msra.mxu0 %v530
  %661 = vmatpush.bf16.msra.mxu0 %v524
  %662 = vmatpush.bf16.msra.mxu0 %v518
  %663 = vmatmul.bf16.gmra.mxu0 %v569
  %v664 = vpop.f32.mrf.mxu0
  %v665 = vadd.f32 0.0, %v664
  %v666 = vpop.f32.mrf.mxu0
  %667 = vdwg.mxu0
  %v668 = vld [vmem:[%s3] sm:$0xff]
  %v669 = vmul.f32 %v600, %v168
  %v670 = vmul.f32 %v613, %v169
  %v671 = vmul.f32 %v626, %v170
  %v672 = vmul.f32 %v639, %v171
  %v673 = vmul.f32 %v652, %v172
  %v674 = vmul.f32 %v665, %v173
  %v675 = vadd.f32 %v669, %v670
  %v676 = vadd.f32 %v675, %v671
  %v677 = vadd.f32 %v676, %v672
  %v678 = vadd.f32 %v677, %v673
  %v679 = vadd.f32 %v678, %v674
  %680 = vadd.xlane.f32.xlu0 %v679
  %v681 = vpop.xlane.xlu0 %680
  %v682 = vrcp.pop 512.0
  %v683 = vmul.f32 512.0, %v682
  %v684 = vsub.f32 1.0, %v683
  %v685 = vmul.f32 %v682, %v684
  %v686 = vadd.f32 %v682, %v685
  %vm687 = vweird.f32 %v682
  %v688 = vsel %vm687, %v682, %v686
  %v689 = vmul.f32 %v681, %v688
  %v690 = vsub.f32 %v600, %v689
  %v691 = vsub.f32 %v613, %v689
  %v692 = vsub.f32 %v626, %v689
  %v693 = vsub.f32 %v639, %v689
  %v694 = vsub.f32 %v652, %v689
  %v695 = vsub.f32 %v665, %v689
  %v696 = vmul.f32 %v690, %v690
  %v697 = vmul.f32 %v691, %v691
  %v698 = vmul.f32 %v692, %v692
  %v699 = vmul.f32 %v693, %v693
  %v700 = vmul.f32 %v694, %v694
  %v701 = vmul.f32 %v695, %v695
  %v702 = vmul.f32 %v696, %v168
  %v703 = vmul.f32 %v697, %v169
  %v704 = vmul.f32 %v698, %v170
  %v705 = vmul.f32 %v699, %v171
  %v706 = vmul.f32 %v700, %v172
  %v707 = vmul.f32 %v701, %v173
  %v708 = vadd.f32 %v702, %v703
  %v709 = vadd.f32 %v708, %v704
  %v710 = vadd.f32 %v709, %v705
  %v711 = vadd.f32 %v710, %v706
  %v712 = vadd.f32 %v711, %v707
  %713 = vadd.xlane.f32.xlu0 %v712
  %v714 = vpop.xlane.xlu0 %713
  %v715 = vmul.f32 %v714, %v688
  %v716 = vadd.f32 %v715, 1e-05
  %v717 = vrsqrt.pop %v716
  %v718 = vmul.f32 %v717, %v716
  %v719 = vmul.f32 %v718, %v717
  %v720 = vmul.f32 0.5, %v719
  %v721 = vsub.f32 1.5, %v720
  %v722 = vmul.f32 %v717, %v721
  %vm723 = vweird.f32 %v716
  %vm724 = vweird.f32 %v717
  %vm725 = vmor %vm723, %vm724
  %v726 = vsel %vm725, %v717, %v722
  %v727 = vmul.f32 %v690, %v726
  %v728 = vmul.f32 %v691, %v726
  %v729 = vmul.f32 %v692, %v726
  %v730 = vmul.f32 %v693, %v726
  %v731 = vmul.f32 %v694, %v726
  %v732 = vmul.f32 %v695, %v726
  %734 = vset.pattern.permute.xlu0 0
  %735 = vperm.xlu0 %734, %v668
  %v736 = vpop.permute.xlu0 %735
  %v738 = vadd.f32 %v727, %v736
  %v739 = vadd.f32 %v728, %v736
  %v740 = vadd.f32 %v729, %v736
  %v741 = vadd.f32 %v730, %v736
  %v742 = vadd.f32 %v731, %v736
  %v743 = vadd.f32 %v732, %v736
  %v744 = vmax.f32 %v738, 0.0
  %v745 = vmax.f32 %v739, 0.0
  %v746 = vmax.f32 %v740, 0.0
  %v747 = vmax.f32 %v741, 0.0
  %v748 = vmax.f32 %v742, 0.0
  %v749 = vmax.f32 %v743, 0.0
  %v750 = vmul.f32 %v744, %v168
  %v751 = vmul.f32 %v745, %v169
  %v752 = vmul.f32 %v746, %v170
  %v753 = vmul.f32 %v747, %v171
  %v754 = vmul.f32 %v748, %v172
  %v755 = vmul.f32 %v749, %v173
  %756 = vst [vmem:[#allocation3] sm:$0xf] 0
  %757 = vst [vmem:[#allocation3 + $0x1c] sm:$0xf] 0
  %v758 = vpack.c.bf16 %v751, %v750
  %v759 = vpack.c.bf16 %v753, %v752
  %v760 = vpack.c.bf16 %v755, %v754
  %761 = vst [vmem:[#allocation3 + $0x4] sm:$0xff] %v758
  %762 = vst [vmem:[#allocation3 + $0xc] sm:$0xff] %v759
  %763 = vst [vmem:[#allocation3 + $0x14] sm:$0xff] %v760
  %v764 = vld [vmem:[#allocation3] sm:$0xff]
  %v765 = vld [vmem:[#allocation3 + $0x8] sm:$0xff]
  %v766 = vld [vmem:[#allocation3 + $0x10] sm:$0xff]
  %v767 = vld [vmem:[#allocation3 + $0x18] sm:$0xff]
  %772 = vrot.lane.b32.xlu0 %v764, 19
  %v773 = vpop.permute.xlu0 %772
  %774 = vrot.lane.b32.xlu0 %v765, 19
  %v775 = vpop.permute.xlu0 %774
  %776 = vrot.lane.b32.xlu0 %v766, 19
  %v777 = vpop.permute.xlu0 %776
  %778 = vrot.lane.b32.xlu0 %v767, 19
  %v779 = vpop.permute.xlu0 %778
  %v780 = vrot.slane %v773, 4
  %v781 = vrot.slane %v775, 4
  %v782 = vrot.slane %v777, 4
  %v783 = vrot.slane %v779, 4
  %v784 = vsel %vm202, %v780, %v781
  %v785 = vsel %vm204, %v773, %v784
  %v786 = vsel %vm202, %v781, %v782
  %v787 = vsel %vm204, %v775, %v786
  %v788 = vsel %vm202, %v782, %v783
  %v789 = vsel %vm204, %v777, %v788
  %793 = vst [vmem:[#allocation2] sm:$0xff] %v785
  %794 = vst [vmem:[#allocation2 + $0x8] sm:$0xff] %v787
  %795 = vst [vmem:[#allocation2 + $0x10] sm:$0xff] %v789
  %796 = vrot.lane.b32.xlu0 %v764, 18
  %v797 = vpop.permute.xlu0 %796
  %798 = vrot.lane.b32.xlu0 %v765, 18
  %v799 = vpop.permute.xlu0 %798
  %800 = vrot.lane.b32.xlu0 %v766, 18
  %v801 = vpop.permute.xlu0 %800
  %802 = vrot.lane.b32.xlu0 %v767, 18
  %v803 = vpop.permute.xlu0 %802
  %v804 = vrot.slane %v797, 4
  %v805 = vrot.slane %v799, 4
  %v806 = vrot.slane %v801, 4
  %v807 = vrot.slane %v803, 4
  %v808 = vsel %vm202, %v804, %v805
  %v809 = vsel %vm229, %v797, %v808
  %v810 = vsel %vm202, %v805, %v806
  %v811 = vsel %vm229, %v799, %v810
  %v812 = vsel %vm202, %v806, %v807
  %v813 = vsel %vm229, %v801, %v812
  %817 = vst [vmem:[#allocation2 + $0x18] sm:$0xff] %v809
  %818 = vst [vmem:[#allocation2 + $0x20] sm:$0xff] %v811
  %819 = vst [vmem:[#allocation2 + $0x28] sm:$0xff] %v813
  %820 = vrot.lane.b32.xlu0 %v764, 17
  %v821 = vpop.permute.xlu0 %820
  %822 = vrot.lane.b32.xlu0 %v765, 17
  %v823 = vpop.permute.xlu0 %822
  %824 = vrot.lane.b32.xlu0 %v766, 17
  %v825 = vpop.permute.xlu0 %824
  %826 = vrot.lane.b32.xlu0 %v767, 17
  %v827 = vpop.permute.xlu0 %826
  %v828 = vrot.slane %v821, 4
  %v829 = vrot.slane %v823, 4
  %v830 = vrot.slane %v825, 4
  %v831 = vrot.slane %v827, 4
  %v832 = vsel %vm202, %v828, %v829
  %v833 = vsel %vm254, %v821, %v832
  %v834 = vsel %vm202, %v829, %v830
  %v835 = vsel %vm254, %v823, %v834
  %v836 = vsel %vm202, %v830, %v831
  %v837 = vsel %vm254, %v825, %v836
  %841 = vst [vmem:[#allocation2 + $0x30] sm:$0xff] %v833
  %842 = vst [vmem:[#allocation2 + $0x38] sm:$0xff] %v835
  %843 = vst [vmem:[#allocation2 + $0x40] sm:$0xff] %v837
  %844 = vrot.lane.b32.xlu0 %v764, 1
  %v845 = vpop.permute.xlu0 %844
  %846 = vrot.lane.b32.xlu0 %v765, 1
  %v847 = vpop.permute.xlu0 %846
  %848 = vrot.lane.b32.xlu0 %v766, 1
  %v849 = vpop.permute.xlu0 %848
  %850 = vrot.lane.b32.xlu0 %v767, 1
  %v851 = vpop.permute.xlu0 %850
  %v852 = vrot.slane %v845, 4
  %v853 = vrot.slane %v847, 4
  %v854 = vrot.slane %v849, 4
  %v855 = vrot.slane %v851, 4
  %v856 = vsel %vm202, %v852, %v853
  %v857 = vsel %vm279, %v845, %v856
  %v858 = vsel %vm202, %v853, %v854
  %v859 = vsel %vm279, %v847, %v858
  %v860 = vsel %vm202, %v854, %v855
  %v861 = vsel %vm279, %v849, %v860
  %865 = vst [vmem:[#allocation2 + $0x48] sm:$0xff] %v857
  %866 = vst [vmem:[#allocation2 + $0x50] sm:$0xff] %v859
  %867 = vst [vmem:[#allocation2 + $0x58] sm:$0xff] %v861
  %v868 = vrot.slane %v764, 4
  %v869 = vrot.slane %v765, 4
  %v870 = vrot.slane %v766, 4
  %v871 = vrot.slane %v767, 4
  %v872 = vsel %vm202, %v868, %v869
  %v873 = vsel %vm202, %v869, %v870
  %v874 = vsel %vm202, %v870, %v871
  %878 = vst [vmem:[#allocation2 + $0x60] sm:$0xff] %v872
  %879 = vst [vmem:[#allocation2 + $0x68] sm:$0xff] %v873
  %880 = vst [vmem:[#allocation2 + $0x70] sm:$0xff] %v874
  %881 = vrot.lane.b32.xlu0 %v764, 127
  %v882 = vpop.permute.xlu0 %881
  %883 = vrot.lane.b32.xlu0 %v765, 127
  %v884 = vpop.permute.xlu0 %883
  %885 = vrot.lane.b32.xlu0 %v766, 127
  %v886 = vpop.permute.xlu0 %885
  %887 = vrot.lane.b32.xlu0 %v767, 127
  %v888 = vpop.permute.xlu0 %887
  %v889 = vrot.slane %v882, 4
  %v890 = vrot.slane %v884, 4
  %v891 = vrot.slane %v886, 4
  %v892 = vrot.slane %v888, 4
  %v893 = vsel %vm202, %v889, %v890
  %v894 = vsel %vm317, %v893, %v884
  %v895 = vsel %vm202, %v890, %v891
  %v896 = vsel %vm317, %v895, %v886
  %v897 = vsel %vm202, %v891, %v892
  %v898 = vsel %vm317, %v897, %v888
  %902 = vst [vmem:[#allocation2 + $0x78] sm:$0xff] %v894
  %903 = vst [vmem:[#allocation2 + $0x80] sm:$0xff] %v896
  %904 = vst [vmem:[#allocation2 + $0x88] sm:$0xff] %v898
  %905 = vrot.lane.b32.xlu0 %v764, 111
  %v906 = vpop.permute.xlu0 %905
  %907 = vrot.lane.b32.xlu0 %v765, 111
  %v908 = vpop.permute.xlu0 %907
  %909 = vrot.lane.b32.xlu0 %v766, 111
  %v910 = vpop.permute.xlu0 %909
  %911 = vrot.lane.b32.xlu0 %v767, 111
  %v912 = vpop.permute.xlu0 %911
  %v913 = vrot.slane %v906, 4
  %v914 = vrot.slane %v908, 4
  %v915 = vrot.slane %v910, 4
  %v916 = vrot.slane %v912, 4
  %v917 = vsel %vm202, %v913, %v914
  %v918 = vsel %vm342, %v917, %v908
  %v919 = vsel %vm202, %v914, %v915
  %v920 = vsel %vm342, %v919, %v910
  %v921 = vsel %vm202, %v915, %v916
  %v922 = vsel %vm342, %v921, %v912
  %926 = vst [vmem:[#allocation2 + $0x90] sm:$0xff] %v918
  %927 = vst [vmem:[#allocation2 + $0x98] sm:$0xff] %v920
  %928 = vst [vmem:[#allocation2 + $0xa0] sm:$0xff] %v922
  %929 = vrot.lane.b32.xlu0 %v764, 110
  %v930 = vpop.permute.xlu0 %929
  %931 = vrot.lane.b32.xlu0 %v765, 110
  %v932 = vpop.permute.xlu0 %931
  %933 = vrot.lane.b32.xlu0 %v766, 110
  %v934 = vpop.permute.xlu0 %933
  %935 = vrot.lane.b32.xlu0 %v767, 110
  %v936 = vpop.permute.xlu0 %935
  %v937 = vrot.slane %v930, 4
  %v938 = vrot.slane %v932, 4
  %v939 = vrot.slane %v934, 4
  %v940 = vrot.slane %v936, 4
  %v941 = vsel %vm202, %v937, %v938
  %v942 = vsel %vm367, %v941, %v932
  %v943 = vsel %vm202, %v938, %v939
  %v944 = vsel %vm367, %v943, %v934
  %v945 = vsel %vm202, %v939, %v940
  %v946 = vsel %vm367, %v945, %v936
  %950 = vst [vmem:[#allocation2 + $0xa8] sm:$0xff] %v942
  %951 = vst [vmem:[#allocation2 + $0xb0] sm:$0xff] %v944
  %952 = vst [vmem:[#allocation2 + $0xb8] sm:$0xff] %v946
  %953 = vrot.lane.b32.xlu0 %v764, 109
  %v954 = vpop.permute.xlu0 %953
  %955 = vrot.lane.b32.xlu0 %v765, 109
  %v956 = vpop.permute.xlu0 %955
  %957 = vrot.lane.b32.xlu0 %v766, 109
  %v958 = vpop.permute.xlu0 %957
  %959 = vrot.lane.b32.xlu0 %v767, 109
  %v960 = vpop.permute.xlu0 %959
  %v961 = vrot.slane %v954, 4
  %v962 = vrot.slane %v956, 4
  %v963 = vrot.slane %v958, 4
  %v964 = vrot.slane %v960, 4
  %v965 = vsel %vm202, %v961, %v962
  %v966 = vsel %vm392, %v965, %v956
  %v967 = vsel %vm202, %v962, %v963
  %v968 = vsel %vm392, %v967, %v958
  %v969 = vsel %vm202, %v963, %v964
  %v970 = vsel %vm392, %v969, %v960
  %974 = vst [vmem:[#allocation2 + $0xc0] sm:$0xff] %v966
  %975 = vst [vmem:[#allocation2 + $0xc8] sm:$0xff] %v968
  %976 = vst [vmem:[#allocation2 + $0xd0] sm:$0xff] %v970
  %v977 = vld [vmem:[%s2] sm:$0xf]
  %v978 = vld [vmem:[#allocation2] sm:$0xff]
  %v979 = vld [vmem:[#allocation2 + $0x8] sm:$0xff]
  %v980 = vld [vmem:[#allocation2 + $0x10] sm:$0xff]
  %v981 = vld [vmem:[#allocation2 + $0x18] sm:$0xff]
  %v982 = vld [vmem:[#allocation2 + $0x20] sm:$0xff]
  %v983 = vld [vmem:[#allocation2 + $0x28] sm:$0xff]
  %v984 = vld [vmem:[#allocation2 + $0x30] sm:$0xff]
  %v985 = vld [vmem:[#allocation2 + $0x38] sm:$0xff]
  %v986 = vld [vmem:[#allocation2 + $0x40] sm:$0xff]
  %v987 = vld [vmem:[#allocation2 + $0x48] sm:$0xff]
  %v988 = vld [vmem:[#allocation2 + $0x50] sm:$0xff]
  %v989 = vld [vmem:[#allocation2 + $0x58] sm:$0xff]
  %v990 = vld [vmem:[#allocation2 + $0x60] sm:$0xff]
  %v991 = vld [vmem:[#allocation2 + $0x68] sm:$0xff]
  %v992 = vld [vmem:[#allocation2 + $0x70] sm:$0xff]
  %v993 = vld [vmem:[#allocation2 + $0x78] sm:$0xff]
  %v994 = vld [vmem:[#allocation2 + $0x80] sm:$0xff]
  %v995 = vld [vmem:[#allocation2 + $0x88] sm:$0xff]
  %v996 = vld [vmem:[#allocation2 + $0x90] sm:$0xff]
  %v997 = vld [vmem:[#allocation2 + $0x98] sm:$0xff]
  %v998 = vld [vmem:[#allocation2 + $0xa0] sm:$0xff]
  %v999 = vld [vmem:[#allocation2 + $0xa8] sm:$0xff]
  %v1000 = vld [vmem:[#allocation2 + $0xb0] sm:$0xff]
  %v1001 = vld [vmem:[#allocation2 + $0xb8] sm:$0xff]
  %v1002 = vld [vmem:[#allocation2 + $0xc0] sm:$0xff]
  %v1003 = vld [vmem:[#allocation2 + $0xc8] sm:$0xff]
  %v1004 = vld [vmem:[#allocation2 + $0xd0] sm:$0xff]
  %v1032 = vunpack.c.l.b16 %v978
  %v1033 = vunpack.c.h.b16 %v978
  %v1034 = vunpack.c.l.b16 %v979
  %v1035 = vunpack.c.h.b16 %v979
  %v1036 = vunpack.c.l.b16 %v980
  %v1037 = vunpack.c.h.b16 %v980
  %v1038 = vunpack.c.l.b16 %v981
  %v1039 = vunpack.c.h.b16 %v981
  %v1040 = vunpack.c.l.b16 %v982
  %v1041 = vunpack.c.h.b16 %v982
  %v1042 = vunpack.c.l.b16 %v983
  %v1043 = vunpack.c.h.b16 %v983
  %v1044 = vunpack.c.l.b16 %v984
  %v1045 = vunpack.c.h.b16 %v984
  %v1046 = vunpack.c.l.b16 %v985
  %v1047 = vunpack.c.h.b16 %v985
  %v1048 = vunpack.c.l.b16 %v986
  %v1049 = vunpack.c.h.b16 %v986
  %v1050 = vunpack.c.l.b16 %v987
  %v1051 = vunpack.c.h.b16 %v987
  %v1052 = vunpack.c.l.b16 %v988
  %v1053 = vunpack.c.h.b16 %v988
  %v1054 = vunpack.c.l.b16 %v989
  %v1055 = vunpack.c.h.b16 %v989
  %v1056 = vunpack.c.l.b16 %v990
  %v1057 = vunpack.c.h.b16 %v990
  %v1058 = vunpack.c.l.b16 %v991
  %v1059 = vunpack.c.h.b16 %v991
  %v1060 = vunpack.c.l.b16 %v992
  %v1061 = vunpack.c.h.b16 %v992
  %v1062 = vunpack.c.l.b16 %v993
  %v1063 = vunpack.c.h.b16 %v993
  %v1064 = vunpack.c.l.b16 %v994
  %v1065 = vunpack.c.h.b16 %v994
  %v1066 = vunpack.c.l.b16 %v995
  %v1067 = vunpack.c.h.b16 %v995
  %v1068 = vunpack.c.l.b16 %v996
  %v1069 = vunpack.c.h.b16 %v996
  %v1070 = vunpack.c.l.b16 %v997
  %v1071 = vunpack.c.h.b16 %v997
  %v1072 = vunpack.c.l.b16 %v998
  %v1073 = vunpack.c.h.b16 %v998
  %v1074 = vunpack.c.l.b16 %v999
  %v1075 = vunpack.c.h.b16 %v999
  %v1076 = vunpack.c.l.b16 %v1000
  %v1077 = vunpack.c.h.b16 %v1000
  %v1078 = vunpack.c.l.b16 %v1001
  %v1079 = vunpack.c.h.b16 %v1001
  %v1080 = vunpack.c.l.b16 %v1002
  %v1081 = vunpack.c.h.b16 %v1002
  %v1082 = vunpack.c.l.b16 %v1003
  %v1083 = vunpack.c.h.b16 %v1003
  %v1084 = vunpack.c.l.b16 %v1004
  %v1085 = vunpack.c.h.b16 %v1004
  %v1086 = vpack.c.b16 %v1038, %v1032
  %v1087 = vpack.c.b16 %v1039, %v1033
  %v1088 = vpack.c.b16 %v1040, %v1034
  %v1089 = vpack.c.b16 %v1041, %v1035
  %v1090 = vpack.c.b16 %v1042, %v1036
  %v1091 = vpack.c.b16 %v1043, %v1037
  %v1092 = vpack.c.b16 %v1050, %v1044
  %v1093 = vpack.c.b16 %v1051, %v1045
  %v1094 = vpack.c.b16 %v1052, %v1046
  %v1095 = vpack.c.b16 %v1053, %v1047
  %v1096 = vpack.c.b16 %v1054, %v1048
  %v1097 = vpack.c.b16 %v1055, %v1049
  %v1098 = vpack.c.b16 %v1062, %v1056
  %v1099 = vpack.c.b16 %v1063, %v1057
  %v1100 = vpack.c.b16 %v1064, %v1058
  %v1101 = vpack.c.b16 %v1065, %v1059
  %v1102 = vpack.c.b16 %v1066, %v1060
  %v1103 = vpack.c.b16 %v1067, %v1061
  %v1104 = vpack.c.b16 %v1074, %v1068
  %v1105 = vpack.c.b16 %v1075, %v1069
  %v1106 = vpack.c.b16 %v1076, %v1070
  %v1107 = vpack.c.b16 %v1077, %v1071
  %v1108 = vpack.c.b16 %v1078, %v1072
  %v1109 = vpack.c.b16 %v1079, %v1073
  %v1110 = vpack.c.b16 %v1080, %v1080
  %v1111 = vpack.c.b16 %v1081, %v1081
  %v1112 = vpack.c.b16 %v1082, %v1082
  %v1113 = vpack.c.b16 %v1083, %v1083
  %v1114 = vpack.c.b16 %v1084, %v1084
  %v1115 = vpack.c.b16 %v1085, %v1085
  %v1141 = vsel %vm567, %v977, 0
  %v1144 = vsel %vm571, %v1110, 0
  %v1147 = vsel %vm571, %v1111, 0
  %v1150 = vsel %vm571, %v1112, 0
  %v1153 = vsel %vm571, %v1113, 0
  %v1156 = vsel %vm571, %v1114, 0
  %v1159 = vsel %vm571, %v1115, 0
  %1161 = vmatpush.bf16.msra.mxu0 0
  %1162 = vmatpush.bf16.msra.mxu0 0
  %1163 = vmatpush.bf16.msra.mxu0 0
  %1164 = vmatpush.bf16.msra.mxu0 %v1144
  %1165 = vmatpush.bf16.msra.mxu0 %v1104
  %1166 = vmatpush.bf16.msra.mxu0 %v1098
  %1167 = vmatpush.bf16.msra.mxu0 %v1092
  %1168 = vmatpush.bf16.msra.mxu0 %v1086
  %1169 = vmatmul.bf16.gmra.mxu0 %v1141
  %v1170 = vpop.f32.mrf.mxu0
  %v1171 = vadd.f32 0.0, %v1170
  %v1172 = vpop.f32.mrf.mxu0
  %1173 = vdwg.mxu0
  %1174 = vmatpush.bf16.msra.mxu0 0
  %1175 = vmatpush.bf16.msra.mxu0 0
  %1176 = vmatpush.bf16.msra.mxu0 0
  %1177 = vmatpush.bf16.msra.mxu0 %v1147
  %1178 = vmatpush.bf16.msra.mxu0 %v1105
  %1179 = vmatpush.bf16.msra.mxu0 %v1099
  %1180 = vmatpush.bf16.msra.mxu0 %v1093
  %1181 = vmatpush.bf16.msra.mxu0 %v1087
  %1182 = vmatmul.bf16.gmra.mxu0 %v1141
  %v1183 = vpop.f32.mrf.mxu0
  %v1184 = vadd.f32 0.0, %v1183
  %v1185 = vpop.f32.mrf.mxu0
  %1186 = vdwg.mxu0
  %1187 = vmatpush.bf16.msra.mxu0 0
  %1188 = vmatpush.bf16.msra.mxu0 0
  %1189 = vmatpush.bf16.msra.mxu0 0
  %1190 = vmatpush.bf16.msra.mxu0 %v1150
  %1191 = vmatpush.bf16.msra.mxu0 %v1106
  %1192 = vmatpush.bf16.msra.mxu0 %v1100
  %1193 = vmatpush.bf16.msra.mxu0 %v1094
  %1194 = vmatpush.bf16.msra.mxu0 %v1088
  %1195 = vmatmul.bf16.gmra.mxu0 %v1141
  %v1196 = vpop.f32.mrf.mxu0
  %v1197 = vadd.f32 0.0, %v1196
  %v1198 = vpop.f32.mrf.mxu0
  %1199 = vdwg.mxu0
  %1200 = vmatpush.bf16.msra.mxu0 0
  %1201 = vmatpush.bf16.msra.mxu0 0
  %1202 = vmatpush.bf16.msra.mxu0 0
  %1203 = vmatpush.bf16.msra.mxu0 %v1153
  %1204 = vmatpush.bf16.msra.mxu0 %v1107
  %1205 = vmatpush.bf16.msra.mxu0 %v1101
  %1206 = vmatpush.bf16.msra.mxu0 %v1095
  %1207 = vmatpush.bf16.msra.mxu0 %v1089
  %1208 = vmatmul.bf16.gmra.mxu0 %v1141
  %v1209 = vpop.f32.mrf.mxu0
  %v1210 = vadd.f32 0.0, %v1209
  %v1211 = vpop.f32.mrf.mxu0
  %1212 = vdwg.mxu0
  %1213 = vmatpush.bf16.msra.mxu0 0
  %1214 = vmatpush.bf16.msra.mxu0 0
  %1215 = vmatpush.bf16.msra.mxu0 0
  %1216 = vmatpush.bf16.msra.mxu0 %v1156
  %1217 = vmatpush.bf16.msra.mxu0 %v1108
  %1218 = vmatpush.bf16.msra.mxu0 %v1102
  %1219 = vmatpush.bf16.msra.mxu0 %v1096
  %1220 = vmatpush.bf16.msra.mxu0 %v1090
  %1221 = vmatmul.bf16.gmra.mxu0 %v1141
  %v1222 = vpop.f32.mrf.mxu0
  %v1223 = vadd.f32 0.0, %v1222
  %v1224 = vpop.f32.mrf.mxu0
  %1225 = vdwg.mxu0
  %1226 = vmatpush.bf16.msra.mxu0 0
  %1227 = vmatpush.bf16.msra.mxu0 0
  %1228 = vmatpush.bf16.msra.mxu0 0
  %1229 = vmatpush.bf16.msra.mxu0 %v1159
  %1230 = vmatpush.bf16.msra.mxu0 %v1109
  %1231 = vmatpush.bf16.msra.mxu0 %v1103
  %1232 = vmatpush.bf16.msra.mxu0 %v1097
  %1233 = vmatpush.bf16.msra.mxu0 %v1091
  %1234 = vmatmul.bf16.gmra.mxu0 %v1141
  %v1235 = vpop.f32.mrf.mxu0
  %v1236 = vadd.f32 0.0, %v1235
  %v1237 = vpop.f32.mrf.mxu0
  %1238 = vdwg.mxu0
  %v1239 = vld [vmem:[%s4] sm:$0xff]
  %v1240 = vmul.f32 %v1171, %v168
  %v1241 = vmul.f32 %v1184, %v169
  %v1242 = vmul.f32 %v1197, %v170
  %v1243 = vmul.f32 %v1210, %v171
  %v1244 = vmul.f32 %v1223, %v172
  %v1245 = vmul.f32 %v1236, %v173
  %v1246 = vadd.f32 %v1240, %v1241
  %v1247 = vadd.f32 %v1246, %v1242
  %v1248 = vadd.f32 %v1247, %v1243
  %v1249 = vadd.f32 %v1248, %v1244
  %v1250 = vadd.f32 %v1249, %v1245
  %1251 = vadd.xlane.f32.xlu0 %v1250
  %v1252 = vpop.xlane.xlu0 %1251
  %v1253 = vmul.f32 %v1252, %v688
  %v1254 = vsub.f32 %v1171, %v1253
  %v1255 = vsub.f32 %v1184, %v1253
  %v1256 = vsub.f32 %v1197, %v1253
  %v1257 = vsub.f32 %v1210, %v1253
  %v1258 = vsub.f32 %v1223, %v1253
  %v1259 = vsub.f32 %v1236, %v1253
  %v1260 = vmul.f32 %v1254, %v1254
  %v1261 = vmul.f32 %v1255, %v1255
  %v1262 = vmul.f32 %v1256, %v1256
  %v1263 = vmul.f32 %v1257, %v1257
  %v1264 = vmul.f32 %v1258, %v1258
  %v1265 = vmul.f32 %v1259, %v1259
  %v1266 = vmul.f32 %v1260, %v168
  %v1267 = vmul.f32 %v1261, %v169
  %v1268 = vmul.f32 %v1262, %v170
  %v1269 = vmul.f32 %v1263, %v171
  %v1270 = vmul.f32 %v1264, %v172
  %v1271 = vmul.f32 %v1265, %v173
  %v1272 = vadd.f32 %v1266, %v1267
  %v1273 = vadd.f32 %v1272, %v1268
  %v1274 = vadd.f32 %v1273, %v1269
  %v1275 = vadd.f32 %v1274, %v1270
  %v1276 = vadd.f32 %v1275, %v1271
  %1277 = vadd.xlane.f32.xlu0 %v1276
  %v1278 = vpop.xlane.xlu0 %1277
  %v1279 = vmul.f32 %v1278, %v688
  %v1280 = vadd.f32 %v1279, 1e-05
  %v1281 = vrsqrt.pop %v1280
  %v1282 = vmul.f32 %v1281, %v1280
  %v1283 = vmul.f32 %v1282, %v1281
  %v1284 = vmul.f32 0.5, %v1283
  %v1285 = vsub.f32 1.5, %v1284
  %v1286 = vmul.f32 %v1281, %v1285
  %vm1287 = vweird.f32 %v1280
  %vm1288 = vweird.f32 %v1281
  %vm1289 = vmor %vm1287, %vm1288
  %v1290 = vsel %vm1289, %v1281, %v1286
  %v1291 = vmul.f32 %v1254, %v1290
  %v1292 = vmul.f32 %v1255, %v1290
  %v1293 = vmul.f32 %v1256, %v1290
  %v1294 = vmul.f32 %v1257, %v1290
  %v1295 = vmul.f32 %v1258, %v1290
  %v1296 = vmul.f32 %v1259, %v1290
  %1298 = vset.pattern.permute.xlu0 0
  %1299 = vperm.xlu0 %1298, %v1239
  %v1300 = vpop.permute.xlu0 %1299
  %v1302 = vadd.f32 %v1291, %v1300
  %v1303 = vadd.f32 %v1292, %v1300
  %v1304 = vadd.f32 %v1293, %v1300
  %v1305 = vadd.f32 %v1294, %v1300
  %v1306 = vadd.f32 %v1295, %v1300
  %v1307 = vadd.f32 %v1296, %v1300
  %v1308 = vadd.f32 %v1302, %v175
  %v1309 = vadd.f32 %v1303, %v176
  %v1310 = vadd.f32 %v1304, %v177
  %v1311 = vadd.f32 %v1305, %v178
  %v1312 = vadd.f32 %v1306, %v179
  %v1313 = vadd.f32 %v1307, %v180
  %v1314 = vmax.f32 %v1308, 0.0
  %v1315 = vmax.f32 %v1309, 0.0
  %v1316 = vmax.f32 %v1310, 0.0
  %v1317 = vmax.f32 %v1311, 0.0
  %v1318 = vmax.f32 %v1312, 0.0
  %v1319 = vmax.f32 %v1313, 0.0
  %1320 = vst [vmem:[%s5] sm:$0xff] %v1314
  %1321 = vst [vmem:[%s5 + $0x8] sm:$0xff] %v1315
  %1322 = vst [vmem:[%s5 + $0x10] sm:$0xff] %v1316
  %1323 = vst [vmem:[%s5 + $0x18] sm:$0xff] %v1317
  %1324 = vst [vmem:[%s5 + $0x20] sm:$0xff] %v1318
  %1325 = vst [vmem:[%s5 + $0x28] sm:$0xff] %v1319
  // Predicated region
  $region22: #{resblock_forward.1} parent=0 // pred_check
    _
  $region23: #{resblock_forward.1} parent=0 // pred_check_branch
    %1327 = sbr.rel (0) target = $region25
  $region24: #{resblock_forward.1} parent=0 // pred_region
    _
  $region25: #{resblock_forward.1} parent=0 // pred_fallthru
    _
  // Predicated region
  $region26: #{resblock_forward.1} parent=0 // pred_check
    _
  $region27: #{resblock_forward.1} parent=0 // pred_check_branch
    %1329 = sbr.rel (0) target = $region29
  $region28: #{resblock_forward.1} parent=0 // pred_region
    _
  $region29: #{resblock_forward.1} parent=0 // pred_fallthru
    _

</llo_original>
